<compile_context>
chip_gen: v5e
topology: v5e:2x2
jax: 0.10.0
libtpu: 0.0.40
codegen_flags: <defaults>
</compile_context>

<pallas_src>
import math

import jax
import jax.numpy as jnp
from jax.experimental import pallas as pl
from jax.experimental.pallas import tpu as pltpu


# ----------------------------- Pallas kernel --------------------------------
def siren_blk_kernel(
    x_ref,       # (1, Cin, T)    pixel columns for (batch b, hw-tile t)
    coords_ref,  # (2, T)         [row, col] / (img_size * sqrt(2)) for this tile
    aff_ref,     # (1, Cin, 4)    packed [gamma1, beta1, gamma2, beta2](style[b])
    w1_ref,      # (Cin, Cin)     conv1 weight (C_out, C_in)
    bw1_ref,     # (Cin, 1)       conv1 bias
    wf_ref,      # (Cout, 2*Cin)  [conv2 | conv1x1-shortcut padded] * 1/sqrt(2)
    b2_ref,      # (Cout, 1)      conv2 bias * 1/sqrt(2)
    sel_ref,     # (Cout, 2)      coord selector (ones at rows Cout-2 / Cout-1)
    o_ref,       # (1, Cout, T)   output pixel columns
):
    eps = 1e-5

    x = x_ref[0]                               # (Cin, T)
    aff = aff_ref[0]                           # (Cin, 4)
    gamma1, beta1 = aff[:, 0:1], aff[:, 1:2]   # (Cin, 1) each, broadcast over lanes
    gamma2, beta2 = aff[:, 2:3], aff[:, 3:4]

    def pixel_norm(v):                         # normalize over channels (sublanes)
        mu = jnp.mean(v, axis=0, keepdims=True)
        vc = v - mu
        var = jnp.mean(vc * vc, axis=0, keepdims=True)
        return vc * jax.lax.rsqrt(var + eps)   # rsqrt -> EUP slot

    # ---- residual branch ----
    h = jnp.sin(gamma1 * pixel_norm(x) + beta1)
    h = jnp.dot(w1_ref[...], h, preferred_element_type=jnp.float32) + bw1_ref[...]
    h = jnp.sin(gamma2 * pixel_norm(h) + beta2)

    # ---- conv2 (residual) + conv1x1 shortcut, both pre-scaled by 1/sqrt(2) ----
    cin = x.shape[0]
    w2_s = wf_ref[:, :cin]                     # (Cout, Cin)
    wsc_s = wf_ref[:, cin:]                    # (Cout, Cin), last 2 rows are zeros
    y = jnp.dot(w2_s, h, preferred_element_type=jnp.float32)
    y = y + jnp.dot(wsc_s, x, preferred_element_type=jnp.float32) + b2_ref[...]

    # ---- coordinate channels via a tiny MXU dot (MXU is ~idle; keeps VALU free) ----
    y = y + jnp.dot(sel_ref[...], coords_ref[...], preferred_element_type=jnp.float32)

    o_ref[0] = y


# ------------------------------ tiling helpers --------------------------------
def _vmem_budgets():
    """(scoped vmem_limit_bytes, tile-picker byte budget), derived from physical VMEM.
    v7x has only 64 MiB physical VMEM -> 32 MiB scoped; v5e/v6e (128 MiB) -> 64 MiB."""
    phys = 128 * 1024 * 1024
    try:
        phys = int(getattr(pltpu.get_tpu_info(), "vmem_capacity_bytes", phys))
    except Exception:
        pass
    vmem_limit = min(phys // 2, 64 * 1024 * 1024)
    tile_budget = (vmem_limit * 3) // 4
    return vmem_limit, tile_budget


def _pick_tile_hw(hw_padded, cin, cout, batch, budget_bytes, max_tile=16384):
    """Largest multiple of 128 dividing hw_padded (itself a multiple of 128) that
    fits the VMEM budget and keeps batch * n_tiles >= 2 (even if possible) so both
    TensorCores on a v7x chip get balanced work."""
    # double-buffered x / coords / out DMAs  +  live (C, T) f32 intermediates.
    bytes_per_pixel = 4 * (2 * (cin + cout + 2) + 3 * max(cin, cout))
    target = min(max_tile, max(128, budget_bytes // bytes_per_pixel))
    target = (target // 128) * 128

    candidates = [t for t in range(128, min(hw_padded, target) + 1, 128)
                  if hw_padded % t == 0]
    if not candidates:                        # hw_padded % 128 == 0, so 128 always works
        candidates = [128]

    def steps(t):
        return batch * (hw_padded // t)

    even = [t for t in candidates if steps(t) >= 2 and steps(t) % 2 == 0]
    multi = [t for t in candidates if steps(t) >= 2]
    pool = even or multi or candidates
    return max(pool)


# ------------------------------ wrapper --------------------------------------
def siren_blk(x_nchw, style, params, *, tile_hw=None):
    """x_nchw: (B, Cin, H, W) f32, style: (B, style_dim) f32 -> (B, Cout, H, W)."""
    B, Cin, H, W = x_nchw.shape
    Cout = params["w2"].shape[0]
    assert H == W, "SirenBlk coords assume square feature maps (as in the PyTorch module)"
    HW = H * W
    img_size = float(H)
    inv_sqrt2 = 1.0 / math.sqrt(2.0)

    # Pad the pixel axis to a multiple of 128 so output stores are always lane-dense.
    HW_pad = ((HW + 127) // 128) * 128
    pad = HW_pad - HW

    vmem_limit, tile_budget = _vmem_budgets()
    if tile_hw is None:
        tile_hw = _pick_tile_hw(HW_pad, Cin, Cout, B, tile_budget)
    assert HW_pad % tile_hw == 0 and tile_hw % 128 == 0, (HW_pad, tile_hw)
    n_hw_tiles = HW_pad // tile_hw

    # ---- glue (plain JAX, constant-size param prep) --------------------------
    x_flat = x_nchw.reshape(B, Cin, HW)        # pure reshape; no transposes
    if pad:
        x_flat = jnp.pad(x_flat, ((0, 0), (0, 0), (0, pad)))

    # style -> per-channel affine params, packed (B, Cin, 4) = [g1, b1, g2, b2]
    g1 = style @ params["wg1"].T + params["bg1"]
    b1 = style @ params["wb1"].T + params["bb1"]
    g2 = style @ params["wg2"].T + params["bg2"]
    b2 = style @ params["wb2"].T + params["bb2"]
    aff = jnp.stack([g1, b1, g2, b2], axis=-1).astype(jnp.float32)      # (B, Cin, 4)

    # fused output weight: [conv2 | conv1x1-shortcut padded to Cout rows] / sqrt(2)
    wsc_pad = jnp.concatenate(
        [params["wsc"], jnp.zeros((2, Cin), jnp.float32)], axis=0)      # (Cout, Cin)
    w_fused = (jnp.concatenate([params["w2"], wsc_pad], axis=1)
               * inv_sqrt2).astype(jnp.float32)                         # (Cout, 2*Cin)
    bw1 = params["bw1"].reshape(Cin, 1).astype(jnp.float32)
    bw2_s = (params["bw2"] * inv_sqrt2).reshape(Cout, 1).astype(jnp.float32)

    # compact, batch-invariant coordinate rows: [i, j] / (img_size * sqrt(2))
    ii = jnp.repeat(jnp.arange(H, dtype=jnp.float32), W)
    jj = jnp.tile(jnp.arange(W, dtype=jnp.float32), H)
    coords2 = jnp.stack([ii, jj], axis=0) * (inv_sqrt2 / img_size)      # (2, HW)
    if pad:
        coords2 = jnp.pad(coords2, ((0, 0), (0, pad)))                  # (2, HW_pad)

    # (Cout, 2) selector: routes the two coord rows to channels Cout-2 / Cout-1 on the MXU.
    sel = (jnp.zeros((Cout, 2), jnp.float32)
           .at[Cout - 2, 0].set(1.0)
           .at[Cout - 1, 1].set(1.0))

    # TODO(synk): for production configs with Cin <= 4, pack two half-tiles of pixels
    # onto the sublane axis (reshape to (2*Cin, T/2) + kron'd weights) to avoid ~50%
    # sublane padding on the VALU-bound sin path; skipped here for robustness.
    # For very large Cin, consider pipeline_mode=pl.Buffered(1) on the constant-index
    # weight inputs to shave their double-buffer out of the VMEM budget.

    out_flat = pl.pallas_call(
        siren_blk_kernel,
        out_shape=jax.ShapeDtypeStruct((B, Cout, HW_pad), jnp.float32),
        grid_spec=pltpu.PrefetchScalarGridSpec(
            num_scalar_prefetch=0,
            grid=(B, n_hw_tiles),
            in_specs=[
                pl.BlockSpec((1, Cin, tile_hw), lambda b, t: (b, 0, t)),   # x
                pl.BlockSpec((2, tile_hw), lambda b, t: (0, t)),           # coords
                pl.BlockSpec((1, Cin, 4), lambda b, t: (b, 0, 0)),         # affine pack
                pl.BlockSpec((Cin, Cin), lambda b, t: (0, 0)),             # w1
                pl.BlockSpec((Cin, 1), lambda b, t: (0, 0)),               # bw1
                pl.BlockSpec((Cout, 2 * Cin), lambda b, t: (0, 0)),        # w_fused
                pl.BlockSpec((Cout, 1), lambda b, t: (0, 0)),              # bw2 scaled
                pl.BlockSpec((Cout, 2), lambda b, t: (0, 0)),              # coord selector
            ],
            out_specs=pl.BlockSpec((1, Cout, tile_hw), lambda b, t: (b, 0, t)),
        ),
        compiler_params=pltpu.CompilerParams(
            dimension_semantics=("parallel", "parallel"),
            vmem_limit_bytes=vmem_limit,
        ),
    )(x_flat, coords2, aff, params["w1"], bw1, w_fused, bw2_s, sel)

    if pad:
        out_flat = out_flat[:, :, :HW]
    return out_flat.reshape(B, Cout, H, W)


# ------------------------ pure-JAX reference (for checking) ------------------
def siren_blk_reference(x, style, params):
    B, Cin, H, W = x.shape

    def pn(v, eps=1e-5):
        mu = jnp.mean(v, axis=1, keepdims=True)
        vc = v - mu
        var = jnp.mean(vc * vc, axis=1, keepdims=True)
        return vc / jnp.sqrt(var + eps)

    def conv1x1(v, w, b=None):          # w: (C_out, C_in)
        y = jnp.einsum("oc,bchw->bohw", w, v)
        if b is not None:
            y = y + b[None, :, None, None]
        return y

    def affine(wg, bg, wb, bb):
        g = (style @ wg.T + bg)[:, :, None, None]
        bt = (style @ wb.T + bb)[:, :, None, None]
        return g, bt

    g1, b1 = affine(params["wg1"], params["bg1"], params["wb1"], params["bb1"])
    g2, b2 = affine(params["wg2"], params["bg2"], params["wb2"], params["bb2"])

    h = jnp.sin(g1 * pn(x) + b1)
    h = conv1x1(h, params["w1"], params["bw1"])
    h = jnp.sin(g2 * pn(h) + b2)
    res = conv1x1(h, params["w2"], params["bw2"])

    sc = conv1x1(x, params["wsc"])
    img = H
    ii, jj = jnp.meshgrid(jnp.arange(img, dtype=jnp.float32),
                          jnp.arange(img, dtype=jnp.float32), indexing="ij")
    coords = jnp.broadcast_to(jnp.stack([ii, jj], axis=0)[None] / float(img),
                              (B, 2, H, W))
    sc = jnp.concatenate([sc, coords], axis=1)
    return (sc + res) / math.sqrt(2.0)


# ------------------------------- main -----------------------------------------
if __name__ == "__main__":
    B, Cin, Cout, SD = 2, 4, 8, 16

    key = jax.random.PRNGKey(0)
    keys = jax.random.split(key, 16)

    def rnd(k, shape, scale=0.2):
        return scale * jax.random.normal(k, shape, dtype=jnp.float32)

    # Synthetic parameters; conv weights kept in natural PyTorch (C_out, C_in) layout.
    params = {
        "w1":  rnd(keys[0], (Cin, Cin)),        # conv1: Conv2d(Cin, Cin, 1)
        "bw1": rnd(keys[1], (Cin,)),
        "w2":  rnd(keys[2], (Cout, Cin)),       # conv2: Conv2d(Cin, Cout, 1)
        "bw2": rnd(keys[3], (Cout,)),
        "wsc": rnd(keys[4], (Cout - 2, Cin)),   # conv1x1: Conv2d(Cin, Cout-2, 1, bias=False)
        "wg1": rnd(keys[5], (Cin, SD)),         # gamma1_layer: Linear(SD, Cin)
        "bg1": rnd(keys[6], (Cin,)),
        "wb1": rnd(keys[7], (Cin, SD)),         # beta1_layer
        "bb1": rnd(keys[8], (Cin,)),
        "wg2": rnd(keys[9], (Cin, SD)),         # gamma2_layer
        "bg2": rnd(keys[10], (Cin,)),
        "wb2": rnd(keys[11], (Cin, SD)),        # beta2_layer
        "bb2": rnd(keys[12], (Cin,)),
    }

    style = jax.random.normal(keys[14], (B, SD), dtype=jnp.float32)

    # Test 1: 16x16 map (HW=256, multiple of 128) with auto tile selection.
    x16 = jax.random.normal(keys[13], (B, Cin, 16, 16), dtype=jnp.float32)
    out = jax.block_until_ready(siren_blk(x16, style, params))
    ref = jax.block_until_ready(siren_blk_reference(x16, style, params))
    assert out.shape == (B, Cout, 16, 16), out.shape
    err = float(jnp.max(jnp.abs(out - ref)))
    assert jnp.allclose(out, ref, atol=2e-5, rtol=2e-5), err

    # Test 2: 12x12 map (HW=144 -> padded to 256) with an explicit 128 tile:
    # exercises the padding path, multi-tile grid, and per-tile coord offsets.
    x12 = jax.random.normal(keys[15], (B, Cin, 12, 12), dtype=jnp.float32)
    out2 = jax.block_until_ready(siren_blk(x12, style, params, tile_hw=128))
    ref2 = jax.block_until_ready(siren_blk_reference(x12, style, params))
    assert out2.shape == (B, Cout, 12, 12), out2.shape
    err2 = float(jnp.max(jnp.abs(out2 - ref2)))
    assert jnp.allclose(out2, ref2, atol=2e-5, rtol=2e-5), err2

    print("KERNEL_OK")
</pallas_src>

<mosaic_0001>
module attributes {stable_mosaic.version = 11 : i64} {
  func.func @siren_blk_kernel(%arg0: i32, %arg1: i32, %arg2: memref<1x4x256xf32, #tpu.memory_space<vmem>>, %arg3: memref<2x256xf32, #tpu.memory_space<vmem>>, %arg4: memref<1x4x4xf32, #tpu.memory_space<vmem>>, %arg5: memref<4x4xf32, #tpu.memory_space<vmem>>, %arg6: memref<4x1xf32, #tpu.memory_space<vmem>>, %arg7: memref<8x8xf32, #tpu.memory_space<vmem>>, %arg8: memref<8x1xf32, #tpu.memory_space<vmem>>, %arg9: memref<8x2xf32, #tpu.memory_space<vmem>>, %arg10: memref<1x8x256xf32, #tpu.memory_space<vmem>>) attributes {dimension_semantics = [#tpu.dimension_semantics<parallel>, #tpu.dimension_semantics<parallel>], iteration_bounds = array<i64: 2, 1>, scalar_prefetch = 0 : i64, scratch_operands = 0 : i64, tpu.core_type = #tpu.core_type<tc>, window_params = [{transform_indices = @transform_0, window_bounds = array<i64: 1, 4, 256>}, {transform_indices = @transform_1, window_bounds = array<i64: 2, 256>}, {transform_indices = @transform_2, window_bounds = array<i64: 1, 4, 4>}, {pipeline_mode = #tpu.pipeline_mode<synchronous>, transform_indices = @transform_3, window_bounds = array<i64: 4, 4>}, {pipeline_mode = #tpu.pipeline_mode<synchronous>, transform_indices = @transform_4, window_bounds = array<i64: 4, 1>}, {pipeline_mode = #tpu.pipeline_mode<synchronous>, transform_indices = @transform_5, window_bounds = array<i64: 8, 8>}, {pipeline_mode = #tpu.pipeline_mode<synchronous>, transform_indices = @transform_6, window_bounds = array<i64: 8, 1>}, {pipeline_mode = #tpu.pipeline_mode<synchronous>, transform_indices = @transform_7, window_bounds = array<i64: 8, 2>}, {transform_indices = @transform_8, window_bounds = array<i64: 1, 8, 256>}]} {
    %c0 = arith.constant 0 : index
    %c0_0 = arith.constant 0 : index
    %c0_1 = arith.constant 0 : index
    %0 = vector.load %arg2[%c0, %c0_0, %c0_1] : memref<1x4x256xf32, #tpu.memory_space<vmem>>, vector<1x4x256xf32>
    %1 = vector.shape_cast %0 : vector<1x4x256xf32> to vector<4x256xf32>
    %c0_2 = arith.constant 0 : index
    %c0_3 = arith.constant 0 : index
    %c0_4 = arith.constant 0 : index
    %2 = vector.load %arg4[%c0_2, %c0_3, %c0_4] : memref<1x4x4xf32, #tpu.memory_space<vmem>>, vector<1x4x4xf32>
    %3 = vector.shape_cast %2 : vector<1x4x4xf32> to vector<4x4xf32>
    %4 = vector.extract_strided_slice %3 {offsets = [0, 0], sizes = [4, 1], strides = [1, 1]} : vector<4x4xf32> to vector<4x1xf32>
    %5 = vector.extract_strided_slice %3 {offsets = [0, 1], sizes = [4, 1], strides = [1, 1]} : vector<4x4xf32> to vector<4x1xf32>
    %6 = vector.extract_strided_slice %3 {offsets = [0, 2], sizes = [4, 1], strides = [1, 1]} : vector<4x4xf32> to vector<4x1xf32>
    %7 = vector.extract_strided_slice %3 {offsets = [0, 3], sizes = [4, 1], strides = [1, 1]} : vector<4x4xf32> to vector<4x1xf32>
    %cst = arith.constant dense<0.000000e+00> : vector<256xf32>
    %8 = vector.multi_reduction <add>, %1, %cst [0] : vector<4x256xf32> to vector<256xf32>
    %9 = vector.shape_cast %8 : vector<256xf32> to vector<1x256xf32>
    %cst_5 = arith.constant 4.000000e+00 : f32
    %10 = vector.broadcast %cst_5 : f32 to vector<1x256xf32>
    %11 = arith.divf %9, %10 : vector<1x256xf32>
    %12 = vector.broadcast %11 : vector<1x256xf32> to vector<4x256xf32>
    %13 = arith.subf %1, %12 : vector<4x256xf32>
    %14 = arith.mulf %13, %13 : vector<4x256xf32>
    %cst_6 = arith.constant dense<0.000000e+00> : vector<256xf32>
    %15 = vector.multi_reduction <add>, %14, %cst_6 [0] : vector<4x256xf32> to vector<256xf32>
    %16 = vector.shape_cast %15 : vector<256xf32> to vector<1x256xf32>
    %cst_7 = arith.constant 4.000000e+00 : f32
    %17 = vector.broadcast %cst_7 : f32 to vector<1x256xf32>
    %18 = arith.divf %16, %17 : vector<1x256xf32>
    %cst_8 = arith.constant 9.99999974E-6 : f32
    %19 = vector.broadcast %cst_8 : f32 to vector<1x256xf32>
    %20 = arith.addf %18, %19 : vector<1x256xf32>
    %21 = math.rsqrt %20 : vector<1x256xf32>
    %22 = vector.broadcast %21 : vector<1x256xf32> to vector<4x256xf32>
    %23 = arith.mulf %13, %22 : vector<4x256xf32>
    %24 = vector.broadcast %4 : vector<4x1xf32> to vector<4x256xf32>
    %25 = arith.mulf %24, %23 : vector<4x256xf32>
    %26 = vector.broadcast %5 : vector<4x1xf32> to vector<4x256xf32>
    %27 = arith.addf %25, %26 : vector<4x256xf32>
    %28 = math.sin %27 : vector<4x256xf32>
    %c0_9 = arith.constant 0 : index
    %c0_10 = arith.constant 0 : index
    %29 = vector.load %arg5[%c0_9, %c0_10] : memref<4x4xf32, #tpu.memory_space<vmem>>, vector<4x4xf32>
    %cst_11 = arith.constant dense<0.000000e+00> : vector<4x256xf32>
    %30 = tpu.matmul %29, %28, %cst_11 {dimension_numbers = #tpu.dot_dimension_numbers<[1], [0], [0], [1], [0, 0, 1, 1], [], []>} : vector<4x4xf32>, vector<4x256xf32>, vector<4x256xf32> -> vector<4x256xf32>
    %c0_12 = arith.constant 0 : index
    %c0_13 = arith.constant 0 : index
    %31 = vector.load %arg6[%c0_12, %c0_13] : memref<4x1xf32, #tpu.memory_space<vmem>>, vector<4x1xf32>
    %32 = vector.broadcast %31 : vector<4x1xf32> to vector<4x256xf32>
    %33 = arith.addf %30, %32 : vector<4x256xf32>
    %cst_14 = arith.constant dense<0.000000e+00> : vector<256xf32>
    %34 = vector.multi_reduction <add>, %33, %cst_14 [0] : vector<4x256xf32> to vector<256xf32>
    %35 = vector.shape_cast %34 : vector<256xf32> to vector<1x256xf32>
    %cst_15 = arith.constant 4.000000e+00 : f32
    %36 = vector.broadcast %cst_15 : f32 to vector<1x256xf32>
    %37 = arith.divf %35, %36 : vector<1x256xf32>
    %38 = vector.broadcast %37 : vector<1x256xf32> to vector<4x256xf32>
    %39 = arith.subf %33, %38 : vector<4x256xf32>
    %40 = arith.mulf %39, %39 : vector<4x256xf32>
    %cst_16 = arith.constant dense<0.000000e+00> : vector<256xf32>
    %41 = vector.multi_reduction <add>, %40, %cst_16 [0] : vector<4x256xf32> to vector<256xf32>
    %42 = vector.shape_cast %41 : vector<256xf32> to vector<1x256xf32>
    %cst_17 = arith.constant 4.000000e+00 : f32
    %43 = vector.broadcast %cst_17 : f32 to vector<1x256xf32>
    %44 = arith.divf %42, %43 : vector<1x256xf32>
    %cst_18 = arith.constant 9.99999974E-6 : f32
    %45 = vector.broadcast %cst_18 : f32 to vector<1x256xf32>
    %46 = arith.addf %44, %45 : vector<1x256xf32>
    %47 = math.rsqrt %46 : vector<1x256xf32>
    %48 = vector.broadcast %47 : vector<1x256xf32> to vector<4x256xf32>
    %49 = arith.mulf %39, %48 : vector<4x256xf32>
    %50 = vector.broadcast %6 : vector<4x1xf32> to vector<4x256xf32>
    %51 = arith.mulf %50, %49 : vector<4x256xf32>
    %52 = vector.broadcast %7 : vector<4x1xf32> to vector<4x256xf32>
    %53 = arith.addf %51, %52 : vector<4x256xf32>
    %54 = math.sin %53 : vector<4x256xf32>
    %c0_19 = arith.constant 0 : index
    %c0_20 = arith.constant 0 : index
    %55 = vector.load %arg7[%c0_19, %c0_20] : memref<8x8xf32, #tpu.memory_space<vmem>>, vector<8x4xf32>
    %c0_21 = arith.constant 0 : index
    %c4 = arith.constant 4 : index
    %56 = vector.load %arg7[%c0_21, %c4] : memref<8x8xf32, #tpu.memory_space<vmem>>, vector<8x4xf32>
    %cst_22 = arith.constant dense<0.000000e+00> : vector<8x256xf32>
    %57 = tpu.matmul %55, %54, %cst_22 {dimension_numbers = #tpu.dot_dimension_numbers<[1], [0], [0], [1], [0, 0, 1, 1], [], []>} : vector<8x4xf32>, vector<4x256xf32>, vector<8x256xf32> -> vector<8x256xf32>
    %cst_23 = arith.constant dense<0.000000e+00> : vector<8x256xf32>
    %58 = tpu.matmul %56, %1, %cst_23 {dimension_numbers = #tpu.dot_dimension_numbers<[1], [0], [0], [1], [0, 0, 1, 1], [], []>} : vector<8x4xf32>, vector<4x256xf32>, vector<8x256xf32> -> vector<8x256xf32>
    %59 = arith.addf %57, %58 : vector<8x256xf32>
    %c0_24 = arith.constant 0 : index
    %c0_25 = arith.constant 0 : index
    %60 = vector.load %arg8[%c0_24, %c0_25] : memref<8x1xf32, #tpu.memory_space<vmem>>, vector<8x1xf32>
    %61 = vector.broadcast %60 : vector<8x1xf32> to vector<8x256xf32>
    %62 = arith.addf %59, %61 : vector<8x256xf32>
    %c0_26 = arith.constant 0 : index
    %c0_27 = arith.constant 0 : index
    %63 = vector.load %arg9[%c0_26, %c0_27] : memref<8x2xf32, #tpu.memory_space<vmem>>, vector<8x2xf32>
    %c0_28 = arith.constant 0 : index
    %c0_29 = arith.constant 0 : index
    %64 = vector.load %arg3[%c0_28, %c0_29] : memref<2x256xf32, #tpu.memory_space<vmem>>, vector<2x256xf32>
    %cst_30 = arith.constant dense<0.000000e+00> : vector<8x256xf32>
    %65 = tpu.matmul %63, %64, %cst_30 {dimension_numbers = #tpu.dot_dimension_numbers<[1], [0], [0], [1], [0, 0, 1, 1], [], []>} : vector<8x2xf32>, vector<2x256xf32>, vector<8x256xf32> -> vector<8x256xf32>
    %66 = arith.addf %62, %65 : vector<8x256xf32>
    %c0_31 = arith.constant 0 : index
    %c0_32 = arith.constant 0 : index
    %c0_33 = arith.constant 0 : index
    %67 = vector.load %arg10[%c0_31, %c0_32, %c0_33] : memref<1x8x256xf32, #tpu.memory_space<vmem>>, vector<1x8x256xf32>
    %68 = vector.shape_cast %67 : vector<1x8x256xf32> to vector<8x256xf32>
    %69 = vector.shape_cast %66 : vector<8x256xf32> to vector<1x8x256xf32>
    tpu.vector_store %arg10[%c0_31, %c0_32, %c0_33], %69 {strides = array<i32>} : memref<1x8x256xf32, #tpu.memory_space<vmem>>, vector<1x8x256xf32>,
    return
  }
  func.func @transform_0(%arg0: i32, %arg1: i32) -> (i32, i32, i32) {
    %c0_i32 = arith.constant 0 : i32
    %c0_i32_0 = arith.constant 0 : i32
    return %arg0, %c0_i32, %arg1 : i32, i32, i32
  }
  func.func @transform_1(%arg0: i32, %arg1: i32) -> (i32, i32) {
    %c0_i32 = arith.constant 0 : i32
    %c0_i32_0 = arith.constant 0 : i32
    return %c0_i32, %arg1 : i32, i32
  }
  func.func @transform_2(%arg0: i32, %arg1: i32) -> (i32, i32, i32) {
    %c0_i32 = arith.constant 0 : i32
    %c0_i32_0 = arith.constant 0 : i32
    %c0_i32_1 = arith.constant 0 : i32
    return %arg0, %c0_i32, %c0_i32_0 : i32, i32, i32
  }
  func.func @transform_3(%arg0: i32, %arg1: i32) -> (i32, i32) {
    %c0_i32 = arith.constant 0 : i32
    %c0_i32_0 = arith.constant 0 : i32
    %c0_i32_1 = arith.constant 0 : i32
    return %c0_i32, %c0_i32_0 : i32, i32
  }
  func.func @transform_4(%arg0: i32, %arg1: i32) -> (i32, i32) {
    %c0_i32 = arith.constant 0 : i32
    %c0_i32_0 = arith.constant 0 : i32
    %c0_i32_1 = arith.constant 0 : i32
    return %c0_i32, %c0_i32_0 : i32, i32
  }
  func.func @transform_5(%arg0: i32, %arg1: i32) -> (i32, i32) {
    %c0_i32 = arith.constant 0 : i32
    %c0_i32_0 = arith.constant 0 : i32
    %c0_i32_1 = arith.constant 0 : i32
    return %c0_i32, %c0_i32_0 : i32, i32
  }
  func.func @transform_6(%arg0: i32, %arg1: i32) -> (i32, i32) {
    %c0_i32 = arith.constant 0 : i32
    %c0_i32_0 = arith.constant 0 : i32
    %c0_i32_1 = arith.constant 0 : i32
    return %c0_i32, %c0_i32_0 : i32, i32
  }
  func.func @transform_7(%arg0: i32, %arg1: i32) -> (i32, i32) {
    %c0_i32 = arith.constant 0 : i32
    %c0_i32_0 = arith.constant 0 : i32
    %c0_i32_1 = arith.constant 0 : i32
    return %c0_i32, %c0_i32_0 : i32, i32
  }
  func.func @transform_8(%arg0: i32, %arg1: i32) -> (i32, i32, i32) {
    %c0_i32 = arith.constant 0 : i32
    %c0_i32_0 = arith.constant 0 : i32
    return %arg0, %c0_i32, %arg1 : i32, i32, i32
  }
}

</mosaic_0001>

<llo_original>
// kernel: tpu_custom_call.1
$region0: #{tpu_custom_call.1}
  #allocation0 [shape = 'u32[]', space=smem, size = 0x4, offset = 0x4, fixed_abs, tag = 'smem constant byte address 0x4 - core index']
  #allocation1 [shape = 'u32[72,128]{1,0:T(1,128)}', space=vmem, size = 0x9000, scoped, tag = 'internal scratch']
  %s0 = inlined_call_operand.vmem [shape: f32[2,4,256], index: 0, kind: input, shape index: {}]
  %s1 = inlined_call_operand.vmem [shape: f32[2,256], index: 1, kind: input, shape index: {}]
  %s2 = inlined_call_operand.hbm [shape: f32[2,4,4], index: 2, kind: input, shape index: {}]
  %s3 = inlined_call_operand.hbm [shape: f32[4,4], index: 3, kind: input, shape index: {}]
  %s4 = inlined_call_operand.vmem [shape: f32[4,1], index: 4, kind: input, shape index: {}]
  %s5 = inlined_call_operand.hbm [shape: f32[8,8], index: 5, kind: input, shape index: {}]
  %s6 = inlined_call_operand.vmem [shape: f32[8,1], index: 6, kind: input, shape index: {}]
  %s7 = inlined_call_operand.vmem [shape: f32[8,2], index: 7, kind: input, shape index: {}]
  %s8 = inlined_call_operand.hbm [shape: f32[2,8,256], index: 8, kind: output, shape index: {}]
  %s9 = sld [smem:[#allocation0]]
  $region77: #{tpu_custom_call.1} parent=0
    _
  %s11 = ssub.s32 1, %s9
  %s12 = scalar_select 0, %s11, %s9
  $region1: #{tpu_custom_call.1} parent=0
    #allocation2 [shape = 'u8[4096]{0}', space=vmem, size = 0x1000, scoped, tag = 'input window, operand 2']
    #allocation3 [shape = 's32[2]{0}', space=sflag, size = 0x8, scoped, tag = 'scoped memory for tpu_custom_call.1']
    #allocation4 [shape = 's32[2]{0}', space=sflag, size = 0x8, scoped, tag = 'scoped memory for tpu_custom_call.1']
    #allocation5 [shape = 'u8[2048]{0}', space=vmem, size = 0x800, scoped, tag = 'input window, operand 3, single buffered']
    #allocation6 [shape = 's32[1]{0}', space=sflag, size = 0x4, scoped, tag = 'scoped memory for tpu_custom_call.1']
    #allocation7 [shape = 'u8[4096]{0}', space=vmem, size = 0x1000, scoped, tag = 'input window, operand 5, single buffered']
    #allocation8 [shape = 'u8[16384]{0}', space=vmem, size = 0x4000, scoped, tag = 'output window, operand 0']
    %13 = vsyncpa [#allocation3], 0
    %s14 = scalar_lea.sflag [#allocation3], 1
    %15 = vsyncpa %s14, 0
    %16 = vsyncpa [#allocation6], 0
    %17 = vsyncpa [#allocation4], 0
    %s18 = scalar_lea.sflag [#allocation4], 1
    %19 = vsyncpa %s18, 0
    loop: start=0, step=1, limit=4
    $region2: #{tpu_custom_call.1} parent=1 // loop_pre_header
      _
    $region3: #{tpu_custom_call.1} parent=1 // loop_header
      %s21 = sphi 0, %s25
      %p22 = scmp.ge.s32.totalorder %s21, 4
      %s28 = sphi 0, %s40
      %s29 = sphi 0, %s36
      %s30 = sphi 0, %s28
      %s31 = sphi 0, %s29
      %s32 = sphi 0, %s30
      %s33 = sphi 0, %s31
      %s45 = sphi 0, %s47
      %s48 = sphi 0, %s45
      %s49 = sphi 0, %s48
      %s65 = sphi 0, %s49
      %s71 = sphi 0, %s73
      %s74 = sphi 0, %s71
      %s75 = sphi 0, %s74
      %s91 = sphi 0, %s75
      %s97 = sphi 0, %s99
      %s100 = sphi 0, %s97
      %s101 = sphi 0, %s100
      %s117 = sphi 0, %s101
      %s121 = sphi 0, %s121
      %s123 = sphi 0, %s121
      %s124 = sphi 0, %s123
      %s138 = sphi 0, %s124
      %s142 = sphi 0, %s142
      %s144 = sphi 0, %s142
      %s145 = sphi 0, %s144
      %s159 = sphi 0, %s145
      %s163 = sphi 0, %s163
      %s165 = sphi 0, %s163
      %s166 = sphi 0, %s165
      %s180 = sphi 0, %s166
      %s184 = sphi 0, %s184
      %s186 = sphi 0, %s184
      %s187 = sphi 0, %s186
      %s201 = sphi 0, %s187
      %s205 = sphi 0, %s205
      %s207 = sphi 0, %s205
      %s208 = sphi 0, %s207
      %s222 = sphi 0, %s208
      %s230 = sphi 0, %s232
      %s233 = sphi 0, %s230
      %s234 = sphi 0, %s233
      %s250 = sphi 0, %s234
    $region4: #{tpu_custom_call.1} parent=1 // loop_header_branch
      %24 = sbr.rel (%p22) target = $region8
    $region5: #{tpu_custom_call.1} parent=1 // loop_body
      %s26 = ssub.s32 %s21, 1
      %s27 = ssub.s32 %s21, 2
      %s34 = sadd.s32 1, %s29
      %p35 = scmp.ge.s32.totalorder %s34, 1
      %s36 = scalar_select %p35, 0, %s34
      %s37 = sadd.s32 1, %s28
      %s38 = scalar_select %p35, %s37, %s28
      %p39 = scmp.ge.s32.totalorder %s38, 2
      %s40 = scalar_select %p39, 0, %s38
      %s41 = ssub.s32 %s28, %s40
      %s42 = ssub.s32 %s29, %s36
      %s43 = sor.u32 %s41, %s42
      %p44 = scmp.eq.s32.totalorder %s43, 0
      %s46 = sadd.s32 %s45, 1
      %s47 = scalar_select %p44, %s45, %s46
      %p50 = pneg %p44
      %p51 = scmp.eq.s32.totalorder %s21, 1
      %p52 = por %p50, %p51
      %p53 = scmp.ne.s32.totalorder %s45, %s48
      %p54 = scmp.eq.s32.totalorder %s21, 0
      %p55 = por %p53, %p54
      %p56 = scmp.ne.s32.totalorder %s45, %s48
      %p57 = scmp.eq.s32.totalorder %s26, 1
      %p58 = por %p56, %p57
      %p59 = scmp.ne.s32.totalorder %s48, %s49
      %p60 = scmp.eq.s32.totalorder %s26, 0
      %p61 = por %p59, %p60
      %p62 = scmp.ne.s32.totalorder %s48, %s49
      %p63 = scmp.eq.s32.totalorder %s27, 1
      %p64 = por %p62, %p63
      %p66 = scmp.ne.s32.totalorder %s49, %s65
      %p67 = scmp.eq.s32.totalorder %s27, 0
      %p68 = por %p66, %p67
      %s69 = ssub.s32 %s29, %s36
      %p70 = scmp.eq.s32.totalorder %s69, 0
      %s72 = sadd.s32 %s71, 1
      %s73 = scalar_select %p70, %s71, %s72
      %p76 = pneg %p70
      %p77 = scmp.eq.s32.totalorder %s21, 1
      %p78 = por %p76, %p77
      %p79 = scmp.ne.s32.totalorder %s71, %s74
      %p80 = scmp.eq.s32.totalorder %s21, 0
      %p81 = por %p79, %p80
      %p82 = scmp.ne.s32.totalorder %s71, %s74
      %p83 = scmp.eq.s32.totalorder %s26, 1
      %p84 = por %p82, %p83
      %p85 = scmp.ne.s32.totalorder %s74, %s75
      %p86 = scmp.eq.s32.totalorder %s26, 0
      %p87 = por %p85, %p86
      %p88 = scmp.ne.s32.totalorder %s74, %s75
      %p89 = scmp.eq.s32.totalorder %s27, 1
      %p90 = por %p88, %p89
      %p92 = scmp.ne.s32.totalorder %s75, %s91
      %p93 = scmp.eq.s32.totalorder %s27, 0
      %p94 = por %p92, %p93
      %s95 = ssub.s32 %s28, %s40
      %p96 = scmp.eq.s32.totalorder %s95, 0
      %s98 = sadd.s32 %s97, 1
      %s99 = scalar_select %p96, %s97, %s98
      %p102 = pneg %p96
      %p103 = scmp.eq.s32.totalorder %s21, 1
      %p104 = por %p102, %p103
      %p105 = scmp.ne.s32.totalorder %s97, %s100
      %p106 = scmp.eq.s32.totalorder %s21, 0
      %p107 = por %p105, %p106
      %p108 = scmp.ne.s32.totalorder %s97, %s100
      %p109 = scmp.eq.s32.totalorder %s26, 1
      %p110 = por %p108, %p109
      %p111 = scmp.ne.s32.totalorder %s100, %s101
      %p112 = scmp.eq.s32.totalorder %s26, 0
      %p113 = por %p111, %p112
      %p114 = scmp.ne.s32.totalorder %s100, %s101
      %p115 = scmp.eq.s32.totalorder %s27, 1
      %p116 = por %p114, %p115
      %p118 = scmp.ne.s32.totalorder %s101, %s117
      %p119 = scmp.eq.s32.totalorder %s27, 0
      %p120 = por %p118, %p119
      %s122 = sadd.s32 %s121, 1
      %p125 = scmp.eq.s32.totalorder %s21, 1
      %p126 = scmp.ne.s32.totalorder %s121, %s123
      %p127 = scmp.eq.s32.totalorder %s21, 0
      %p128 = por %p126, %p127
      %p129 = scmp.ne.s32.totalorder %s121, %s123
      %p130 = scmp.eq.s32.totalorder %s26, 1
      %p131 = por %p129, %p130
      %p132 = scmp.ne.s32.totalorder %s123, %s124
      %p133 = scmp.eq.s32.totalorder %s26, 0
      %p134 = por %p132, %p133
      %p135 = scmp.ne.s32.totalorder %s123, %s124
      %p136 = scmp.eq.s32.totalorder %s27, 1
      %p137 = por %p135, %p136
      %p139 = scmp.ne.s32.totalorder %s124, %s138
      %p140 = scmp.eq.s32.totalorder %s27, 0
      %p141 = por %p139, %p140
      %s143 = sadd.s32 %s142, 1
      %p146 = scmp.eq.s32.totalorder %s21, 1
      %p147 = scmp.ne.s32.totalorder %s142, %s144
      %p148 = scmp.eq.s32.totalorder %s21, 0
      %p149 = por %p147, %p148
      %p150 = scmp.ne.s32.totalorder %s142, %s144
      %p151 = scmp.eq.s32.totalorder %s26, 1
      %p152 = por %p150, %p151
      %p153 = scmp.ne.s32.totalorder %s144, %s145
      %p154 = scmp.eq.s32.totalorder %s26, 0
      %p155 = por %p153, %p154
      %p156 = scmp.ne.s32.totalorder %s144, %s145
      %p157 = scmp.eq.s32.totalorder %s27, 1
      %p158 = por %p156, %p157
      %p160 = scmp.ne.s32.totalorder %s145, %s159
      %p161 = scmp.eq.s32.totalorder %s27, 0
      %p162 = por %p160, %p161
      %s164 = sadd.s32 %s163, 1
      %p167 = scmp.eq.s32.totalorder %s21, 1
      %p168 = scmp.ne.s32.totalorder %s163, %s165
      %p169 = scmp.eq.s32.totalorder %s21, 0
      %p170 = por %p168, %p169
      %p171 = scmp.ne.s32.totalorder %s163, %s165
      %p172 = scmp.eq.s32.totalorder %s26, 1
      %p173 = por %p171, %p172
      %p174 = scmp.ne.s32.totalorder %s165, %s166
      %p175 = scmp.eq.s32.totalorder %s26, 0
      %p176 = por %p174, %p175
      %p177 = scmp.ne.s32.totalorder %s165, %s166
      %p178 = scmp.eq.s32.totalorder %s27, 1
      %p179 = por %p177, %p178
      %p181 = scmp.ne.s32.totalorder %s166, %s180
      %p182 = scmp.eq.s32.totalorder %s27, 0
      %p183 = por %p181, %p182
      %s185 = sadd.s32 %s184, 1
      %p188 = scmp.eq.s32.totalorder %s21, 1
      %p189 = scmp.ne.s32.totalorder %s184, %s186
      %p190 = scmp.eq.s32.totalorder %s21, 0
      %p191 = por %p189, %p190
      %p192 = scmp.ne.s32.totalorder %s184, %s186
      %p193 = scmp.eq.s32.totalorder %s26, 1
      %p194 = por %p192, %p193
      %p195 = scmp.ne.s32.totalorder %s186, %s187
      %p196 = scmp.eq.s32.totalorder %s26, 0
      %p197 = por %p195, %p196
      %p198 = scmp.ne.s32.totalorder %s186, %s187
      %p199 = scmp.eq.s32.totalorder %s27, 1
      %p200 = por %p198, %p199
      %p202 = scmp.ne.s32.totalorder %s187, %s201
      %p203 = scmp.eq.s32.totalorder %s27, 0
      %p204 = por %p202, %p203
      %s206 = sadd.s32 %s205, 1
      %p209 = scmp.eq.s32.totalorder %s21, 1
      %p210 = scmp.ne.s32.totalorder %s205, %s207
      %p211 = scmp.eq.s32.totalorder %s21, 0
      %p212 = por %p210, %p211
      %p213 = scmp.ne.s32.totalorder %s205, %s207
      %p214 = scmp.eq.s32.totalorder %s26, 1
      %p215 = por %p213, %p214
      %p216 = scmp.ne.s32.totalorder %s207, %s208
      %p217 = scmp.eq.s32.totalorder %s26, 0
      %p218 = por %p216, %p217
      %p219 = scmp.ne.s32.totalorder %s207, %s208
      %p220 = scmp.eq.s32.totalorder %s27, 1
      %p221 = por %p219, %p220
      %p223 = scmp.ne.s32.totalorder %s208, %s222
      %p224 = scmp.eq.s32.totalorder %s27, 0
      %p225 = por %p223, %p224
      %s226 = ssub.s32 %s28, %s40
      %s227 = ssub.s32 %s29, %s36
      %s228 = sor.u32 %s226, %s227
      %p229 = scmp.eq.s32.totalorder %s228, 0
      %s231 = sadd.s32 %s230, 1
      %s232 = scalar_select %p229, %s230, %s231
      %p235 = pneg %p229
      %p236 = scmp.eq.s32.totalorder %s21, 1
      %p237 = por %p235, %p236
      %p238 = scmp.ne.s32.totalorder %s230, %s233
      %p239 = scmp.eq.s32.totalorder %s21, 0
      %p240 = por %p238, %p239
      %p241 = scmp.ne.s32.totalorder %s230, %s233
      %p242 = scmp.eq.s32.totalorder %s26, 1
      %p243 = por %p241, %p242
      %p244 = scmp.ne.s32.totalorder %s233, %s234
      %p245 = scmp.eq.s32.totalorder %s26, 0
      %p246 = por %p244, %p245
      %p247 = scmp.ne.s32.totalorder %s233, %s234
      %p248 = scmp.eq.s32.totalorder %s27, 1
      %p249 = por %p247, %p248
      %p251 = scmp.ne.s32.totalorder %s234, %s250
      %p252 = scmp.eq.s32.totalorder %s27, 0
      %p253 = por %p251, %p252
      %p254 = scmp.le.s32.totalorder 1, %s21
      %p255 = scmp.lt.s32.totalorder %s21, 3
      %p256 = pnand %p254, %p255
      %p257 = pneg %p256
      // Predicated region
      $region9: #{tpu_custom_call.1} parent=5 // pred_check
        _
      $region10: #{tpu_custom_call.1} parent=5 // pred_check_branch
        %259 = sbr.rel (%p256) target = $region12
      $region11: #{tpu_custom_call.1} parent=5 // pred_region
        %s260 = ssub.s32 %s21, 1
        // Predicated region
        $region13: #{tpu_custom_call.1} parent=11 // pred_check
          %p261 = pneg %p87
        $region14: #{tpu_custom_call.1} parent=11 // pred_check_branch
          %263 = sbr.rel (%p261) target = $region16
        $region15: #{tpu_custom_call.1} parent=11 // pred_region
          %s264 = smul.u32 2, %s31
          %p265 = scmp.lt.s32.totalorder %s264, 1
          %s266 = scalar_select %p265, %s264, 1
          %s267 = smul.addr %s266, 2
          %s268 = scalar_lea.vmem %s1, %s267
          %s269 = smul.u32 2, %s31
        $region16: #{tpu_custom_call.1} parent=11 // pred_fallthru
          _
        // Predicated region
        $region17: #{tpu_custom_call.1} parent=11 // pred_check
          %p270 = pneg %p134
        $region18: #{tpu_custom_call.1} parent=11 // pred_check_branch
          %272 = sbr.rel (%p270) target = $region20
        $region19: #{tpu_custom_call.1} parent=11 // pred_region
          %274 = vsyncadd [#allocation6], 0
          %s276 = sshll.u32 %s3, 4
          %s277 = int_to_ptr.hbm [resolvable:$true] %s276
          %s278 = sshll.u32 [#allocation5], 4
          %s279 = int_to_ptr.vmem [resolvable:$true] %s278
          %281 = dma.hbm_to_vmem [thread:$0]  %s277, 64, %s279, [#allocation6]
        $region20: #{tpu_custom_call.1} parent=11 // pred_fallthru
          _
        // Predicated region
        $region21: #{tpu_custom_call.1} parent=11 // pred_check
          %p282 = pneg %p155
        $region22: #{tpu_custom_call.1} parent=11 // pred_check_branch
          %284 = sbr.rel (%p282) target = $region24
        $region23: #{tpu_custom_call.1} parent=11 // pred_region
          _
        $region24: #{tpu_custom_call.1} parent=11 // pred_fallthru
          _
        // Predicated region
        $region25: #{tpu_custom_call.1} parent=11 // pred_check
          %p285 = pneg %p176
        $region26: #{tpu_custom_call.1} parent=11 // pred_check_branch
          %287 = sbr.rel (%p285) target = $region28
        $region27: #{tpu_custom_call.1} parent=11 // pred_region
          %289 = vsyncadd [#allocation6], 0
          %s291 = sshll.u32 %s5, 4
          %s292 = int_to_ptr.hbm [resolvable:$true] %s291
          %s293 = sshll.u32 [#allocation7], 4
          %s294 = int_to_ptr.vmem [resolvable:$true] %s293
          %296 = dma.hbm_to_vmem [thread:$0]  %s292, 128, %s294, [#allocation6]
        $region28: #{tpu_custom_call.1} parent=11 // pred_fallthru
          _
        // Predicated region
        $region29: #{tpu_custom_call.1} parent=11 // pred_check
          %p297 = pneg %p197
        $region30: #{tpu_custom_call.1} parent=11 // pred_check_branch
          %299 = sbr.rel (%p297) target = $region32
        $region31: #{tpu_custom_call.1} parent=11 // pred_region
          _
        $region32: #{tpu_custom_call.1} parent=11 // pred_fallthru
          _
        // Predicated region
        $region33: #{tpu_custom_call.1} parent=11 // pred_check
          %p300 = pneg %p218
        $region34: #{tpu_custom_call.1} parent=11 // pred_check_branch
          %302 = sbr.rel (%p300) target = $region36
        $region35: #{tpu_custom_call.1} parent=11 // pred_region
          _
        $region36: #{tpu_custom_call.1} parent=11 // pred_fallthru
          _
      $region12: #{tpu_custom_call.1} parent=5 // pred_fallthru
        _
      %p303 = scmp.lt.s32.totalorder %s21, 2
      // Predicated region
      $region37: #{tpu_custom_call.1} parent=5 // pred_check
        %p304 = pneg %p303
      $region38: #{tpu_custom_call.1} parent=5 // pred_check_branch
        %306 = sbr.rel (%p304) target = $region40
      $region39: #{tpu_custom_call.1} parent=5 // pred_region
        // Predicated region
        $region41: #{tpu_custom_call.1} parent=39 // pred_check
          %p307 = pneg %p55
        $region42: #{tpu_custom_call.1} parent=39 // pred_check_branch
          %309 = sbr.rel (%p307) target = $region44
        $region43: #{tpu_custom_call.1} parent=39 // pred_region
          %s310 = smul.u32 2, %s29
          %p311 = scmp.lt.s32.totalorder %s28, 1
          %s312 = scalar_select %p311, %s28, 1
          %p313 = scmp.lt.s32.totalorder %s310, 1
          %s314 = scalar_select %p313, %s310, 1
          %s315 = smul.addr %s312, 2
          %s316 = sadd.s32 %s314, %s315
          %s317 = smul.addr %s316, 4
          %s318 = scalar_lea.vmem %s0, %s317
          %s319 = smul.u32 2, %s29
        $region44: #{tpu_custom_call.1} parent=39 // pred_fallthru
          _
        // Predicated region
        $region45: #{tpu_custom_call.1} parent=39 // pred_check
          %p320 = pneg %p107
        $region46: #{tpu_custom_call.1} parent=39 // pred_check_branch
          %322 = sbr.rel (%p320) target = $region48
        $region47: #{tpu_custom_call.1} parent=39 // pred_region
          %s323 = sand.u32 %s97, 1
          %s324 = scalar_lea.sflag [#allocation3], %s323
          %s325 = sand.u32 %s97, 1
          %s326 = smul.addr %s325, 4
          %s327 = scalar_lea.vmem [#allocation2], %s326
          %329 = vsyncadd %s324, 0
          %s330 = smul.addr %s28, 4
          %s331 = scalar_lea.hbm %s2, %s330
          %s333 = sshll.u32 %s331, 4
          %s334 = int_to_ptr.hbm [resolvable:$true] %s333
          %s335 = sshll.u32 %s327, 4
          %s336 = int_to_ptr.vmem [resolvable:$true] %s335
          %338 = dma.hbm_to_vmem [thread:$0]  %s334, 64, %s336, %s324
        $region48: #{tpu_custom_call.1} parent=39 // pred_fallthru
          _
      $region40: #{tpu_custom_call.1} parent=5 // pred_fallthru
        _
      %p339 = scmp.le.s32.totalorder 1, %s21
      %p340 = scmp.lt.s32.totalorder %s21, 3
      %p341 = pnand %p339, %p340
      %p342 = pneg %p341
      // Predicated region
      $region49: #{tpu_custom_call.1} parent=5 // pred_check
        _
      $region50: #{tpu_custom_call.1} parent=5 // pred_check_branch
        %344 = sbr.rel (%p341) target = $region52
      $region51: #{tpu_custom_call.1} parent=5 // pred_region
        %s345 = ssub.s32 %s21, 1
        %s346 = sand.u32 %s100, 1
        %s347 = scalar_lea.sflag [#allocation3], %s346
        %s348 = sand.u32 %s100, 1
        %s349 = smul.addr %s348, 4
        %s350 = scalar_lea.vmem [#allocation2], %s349
        // Predicated region
        $region53: #{tpu_custom_call.1} parent=51 // pred_check
          %p351 = pneg %p113
        $region54: #{tpu_custom_call.1} parent=51 // pred_check_branch
          %353 = sbr.rel (%p351) target = $region56
        $region55: #{tpu_custom_call.1} parent=51 // pred_region
          %355 = dma.done %s347, 64
        $region56: #{tpu_custom_call.1} parent=51 // pred_fallthru
          _
        // Predicated region
        $region57: #{tpu_custom_call.1} parent=51 // pred_check
          %p356 = pneg %p134
        $region58: #{tpu_custom_call.1} parent=51 // pred_check_branch
          %358 = sbr.rel (%p356) target = $region60
        $region59: #{tpu_custom_call.1} parent=51 // pred_region
          %360 = dma.done [#allocation6], 64
        $region60: #{tpu_custom_call.1} parent=51 // pred_fallthru
          _
        // Predicated region
        $region61: #{tpu_custom_call.1} parent=51 // pred_check
          %p361 = pneg %p176
        $region62: #{tpu_custom_call.1} parent=51 // pred_check_branch
          %363 = sbr.rel (%p361) target = $region64
        $region63: #{tpu_custom_call.1} parent=51 // pred_region
          %365 = dma.done [#allocation6], 128
        $region64: #{tpu_custom_call.1} parent=51 // pred_fallthru
          _
        %s366 = smul.u32 2, %s31
        %p367 = scmp.lt.s32.totalorder %s30, 1
        %s368 = scalar_select %p367, %s30, 1
        %p369 = scmp.lt.s32.totalorder %s366, 1
        %s370 = scalar_select %p369, %s366, 1
        %s371 = smul.addr %s368, 2
        %s372 = sadd.s32 %s370, %s371
        %s373 = smul.addr %s372, 4
        %s374 = scalar_lea.vmem %s0, %s373
        %p375 = pneg %p61
        %p376 = pneg %p58
        %s377 = smul.u32 2, %s31
        %p378 = scmp.lt.s32.totalorder %s377, 1
        %s379 = scalar_select %p378, %s377, 1
        %s380 = smul.addr %s379, 2
        %s381 = scalar_lea.vmem %s1, %s380
        %p382 = pneg %p87
        %p383 = pneg %p84
        %s384 = sand.u32 %s100, 1
        %s385 = scalar_lea.sflag [#allocation3], %s384
        %s386 = sand.u32 %s100, 1
        %s387 = smul.addr %s386, 4
        %s388 = scalar_lea.vmem [#allocation2], %s387
        %p389 = pneg %p113
        %p390 = pneg %p110
        %p391 = pneg %p134
        %p392 = pneg %p131
        %p393 = pneg %p155
        %p394 = pneg %p152
        %p395 = pneg %p176
        %p396 = pneg %p173
        %p397 = pneg %p197
        %p398 = pneg %p194
        %p399 = pneg %p218
        %p400 = pneg %p215
        %p401 = pneg %p246
        %p402 = pneg %p243
        %s403 = sand.u32 %s233, 1
        %s404 = scalar_lea.sflag [#allocation4], %s403
        %s405 = sand.u32 %s233, 1
        %s406 = smul.addr %s405, 16
        %s407 = scalar_lea.vmem [#allocation8], %s406
        %s408 = smul.u32 2, %s31
        %p409 = scmp.lt.s32.totalorder %s30, 1
        %s410 = scalar_select %p409, %s30, 1
        %p411 = scmp.lt.s32.totalorder %s408, 1
        %s412 = scalar_select %p411, %s408, 1
        %s413 = smul.addr %s410, 2
        %s414 = sadd.s32 %s412, %s413
        %s415 = smul.addr %s414, 4
        %s416 = scalar_lea.vmem %s0, %s415
        %s417 = smul.u32 2, %s31
        %s418 = smul.u32 2, %s31
        %p419 = scmp.lt.s32.totalorder %s418, 1
        %s420 = scalar_select %p419, %s418, 1
        %s421 = smul.addr %s420, 2
        %s422 = scalar_lea.vmem %s1, %s421
        %s423 = smul.u32 2, %s31
        %s424 = smul.u32 2, %s31
        %v425 = vld [vmem:[%s416] sm:$0xff]
        %v426 = vld [vmem:[%s350] sm:$0xf]
        %428 = vst [vmem:[#allocation1] ss:$2 sm:$0xff] %v425
        %v429 = vld.sshfl [vmem:[#allocation1] sm:$0xff pattern:$0x75316420]
        %v430 = vld.sshfl [vmem:[#allocation1 + $0x8] sm:$0xff pattern:$0x75316420]
        %vm433 = vcmask 1043456
        %v434 = vsel %vm433, %v429, 0.0
        %v435 = vrot.slane %v434, 4
        %v436 = vadd.f32 %v434, %v435
        %v437 = vrot.slane %v436, 2
        %v438 = vadd.f32 %v436, %v437
        %v439 = vrot.slane %v438, 1
        %v440 = vadd.f32 %v438, %v439
        %v441 = vsel %vm433, %v430, 0.0
        %v442 = vrot.slane %v441, 4
        %v443 = vadd.f32 %v441, %v442
        %v444 = vrot.slane %v443, 2
        %v445 = vadd.f32 %v443, %v444
        %v446 = vrot.slane %v445, 1
        %v447 = vadd.f32 %v445, %v446
        %v448 = vrcp.pop 4.0
        %v449 = vmul.f32 4.0, %v448
        %v450 = vsub.f32 1.0, %v449
        %v451 = vmul.f32 %v448, %v450
        %v452 = vadd.f32 %v448, %v451
        %vm453 = vweird.f32 %v448
        %v454 = vsel %vm453, %v448, %v452
        %v455 = vmul.f32 %v440, %v454
        %v456 = vmul.f32 %v447, %v454
        %v459 = vrot.slane %v456, 4
        %v460 = vsel %vm433, %v455, %v459
        %v462 = vsub.f32 %v425, %v460
        %v463 = vmul.f32 %v462, %v462
        %465 = vst [vmem:[#allocation1] ss:$2 sm:$0xff] %v463
        %v466 = vld.sshfl [vmem:[#allocation1] sm:$0xff pattern:$0x75316420]
        %v467 = vld.sshfl [vmem:[#allocation1 + $0x8] sm:$0xff pattern:$0x75316420]
        %v470 = vsel %vm433, %v466, 0.0
        %v471 = vrot.slane %v470, 4
        %v472 = vadd.f32 %v470, %v471
        %v473 = vrot.slane %v472, 2
        %v474 = vadd.f32 %v472, %v473
        %v475 = vrot.slane %v474, 1
        %v476 = vadd.f32 %v474, %v475
        %v477 = vsel %vm433, %v467, 0.0
        %v478 = vrot.slane %v477, 4
        %v479 = vadd.f32 %v477, %v478
        %v480 = vrot.slane %v479, 2
        %v481 = vadd.f32 %v479, %v480
        %v482 = vrot.slane %v481, 1
        %v483 = vadd.f32 %v481, %v482
        %v484 = vmul.f32 %v476, %v454
        %v485 = vmul.f32 %v483, %v454
        %v486 = vadd.f32 %v484, 1e-05
        %v487 = vadd.f32 %v485, 1e-05
        %v488 = vrsqrt.pop %v486
        %v489 = vmul.f32 %v488, %v486
        %v490 = vmul.f32 %v489, %v488
        %v491 = vmul.f32 0.5, %v490
        %v492 = vsub.f32 1.5, %v491
        %v493 = vmul.f32 %v488, %v492
        %vm494 = vweird.f32 %v486
        %vm495 = vweird.f32 %v488
        %vm496 = vmor %vm494, %vm495
        %v497 = vsel %vm496, %v488, %v493
        %v498 = vrsqrt.pop %v487
        %v499 = vmul.f32 %v498, %v487
        %v500 = vmul.f32 %v499, %v498
        %v501 = vmul.f32 0.5, %v500
        %v502 = vsub.f32 1.5, %v501
        %v503 = vmul.f32 %v498, %v502
        %vm504 = vweird.f32 %v487
        %vm505 = vweird.f32 %v498
        %vm506 = vmor %vm504, %vm505
        %v507 = vsel %vm506, %v498, %v503
        %v510 = vrot.slane %v507, 4
        %v511 = vsel %vm433, %v497, %v510
        %v513 = vmul.f32 %v462, %v511
        %515 = vset.pattern.permute.xlu0 0
        %516 = vperm.xlu0 %515, %v426
        %v517 = vpop.permute.xlu0 %516
        %520 = vst [vmem:[#allocation1] ss:$2 sm:$0xff] %v513
        %v521 = vld.sshfl [vmem:[#allocation1] sm:$0xff pattern:$0x75316420]
        %v522 = vld.sshfl [vmem:[#allocation1 + $0x8] sm:$0xff pattern:$0x75316420]
        %v525 = vmul.f32 %v517, %v521
        %v526 = vmul.f32 %v517, %v522
        %527 = vset.pattern.permute.xlu0 1
        %528 = vperm.xlu0 %527, %v426
        %v529 = vpop.permute.xlu0 %528
        %v531 = vadd.f32 %v525, %v529
        %v532 = vadd.f32 %v526, %v529
        %v533 = vand.u32 2147483647, %v531
        %vm534 = vcmp.le.f32.partialorder %v533, 0.7853982
        %vm535 = vcmp.lt.s32.totalorder %v531, 0
        %v536 = vand.u32 %v531, 2139095040
        %v537 = vshrl.u32 %v536, 23
        %v538 = vsub.s32 %v537, 127
        %v539 = vand.u32 2147483647, %v531
        %v540 = vand.u32 %v539, 8388607
        %v541 = vor.u32 %v540, 8388608
        %v542 = vsub.s32 0, %v541
        %v543 = vadd.s32 %v538, 1
        %vm544 = vcmp.gt.s32.totalorder %v543, 0
        %v545 = vsel %vm544, %v543, 0
        %v546 = vshrl.u32 %v545, 5
        %v547 = vand.u32 %v545, 31
        %v548 = vsub.s32 32, %v547
        %v549 = vshrl.u32 683565275, %v548
        %v550 = vshll.u32 683565275, %v547
        %v551 = vshrl.u32 2475754826, %v548
        %v552 = vor.u32 %v550, %v551
        %v553 = vshll.u32 2475754826, %v547
        %v554 = vshrl.u32 2131351028, %v548
        %v555 = vor.u32 %v553, %v554
        %v556 = vshll.u32 2131351028, %v547
        %v557 = vshrl.u32 2102212464, %v548
        %v558 = vor.u32 %v556, %v557
        %v559 = vshll.u32 2102212464, %v547
        %v560 = vshrl.u32 920167782, %v548
        %v561 = vor.u32 %v559, %v560
        %v562 = vshll.u32 920167782, %v547
        %v563 = vshrl.u32 1326507024, %v548
        %v564 = vor.u32 %v562, %v563
        %vm565 = vcmp.lt.s32.totalorder %v546, 1
        %vm566 = vcmp.lt.s32.totalorder %v546, 2
        %vm567 = vcmp.lt.s32.totalorder %v546, 3
        %vm568 = vcmp.lt.s32.totalorder %v546, 4
        %v569 = vsel %vm565, %v549, %v552
        %v570 = vsel %vm568, %v558, 2102212464
        %v571 = vsel %vm567, %v555, %v570
        %v572 = vsel %vm566, %v569, %v571
        %v573 = vsel %vm565, %v552, %v555
        %v574 = vsel %vm568, %v561, 920167782
        %v575 = vsel %vm567, %v558, %v574
        %v576 = vsel %vm566, %v573, %v575
        %v577 = vsel %vm565, %v555, %v558
        %v578 = vsel %vm568, %v564, 1326507024
        %v579 = vsel %vm567, %v561, %v578
        %v580 = vsel %vm566, %v577, %v579
        %v581 = vshll.u32 %v541, 8
        %v582 = vand.u32 %v581, 65535
        %v583 = vshrl.u32 %v581, 16
        %v584 = vand.u32 %v580, 65535
        %v585 = vshrl.u32 %v580, 16
        %v586 = vmul.u32 %v582, %v584
        %v587 = vmul.u32 %v582, %v585
        %v588 = vmul.u32 %v583, %v584
        %v589 = vmul.u32 %v583, %v585
        %v590 = vshll.u32 %v587, 16
        %v591 = vshrl.u32 %v587, 16
        %v592 = vshll.u32 %v588, 16
        %v593 = vshrl.u32 %v588, 16
        %vm594 = vc.u32 %v586, %v590
        %v595 = vsel %vm594, 1, 0
        %v596 = vadd.s32 %v586, %v590
        %v597 = vadd.s32 %v589, %v595
        %vm598 = vc.u32 %v596, %v592
        %v599 = vsel %vm598, 1, 0
        %v600 = vadd.s32 %v596, %v592
        %v601 = vadd.s32 %v597, %v599
        %v602 = vadd.s32 %v601, %v591
        %v603 = vadd.s32 %v602, %v593
        %v604 = vand.u32 %v581, 65535
        %v605 = vshrl.u32 %v581, 16
        %v606 = vand.u32 %v576, 65535
        %v607 = vshrl.u32 %v576, 16
        %v608 = vmul.u32 %v604, %v606
        %v609 = vmul.u32 %v604, %v607
        %v610 = vmul.u32 %v605, %v606
        %v611 = vmul.u32 %v605, %v607
        %v612 = vshll.u32 %v609, 16
        %v613 = vshrl.u32 %v609, 16
        %v614 = vshll.u32 %v610, 16
        %v615 = vshrl.u32 %v610, 16
        %vm616 = vc.u32 %v608, %v612
        %v617 = vsel %vm616, 1, 0
        %v618 = vadd.s32 %v608, %v612
        %v619 = vadd.s32 %v611, %v617
        %vm620 = vc.u32 %v618, %v614
        %v621 = vsel %vm620, 1, 0
        %v622 = vadd.s32 %v618, %v614
        %v623 = vadd.s32 %v619, %v621
        %v624 = vadd.s32 %v623, %v613
        %v625 = vadd.s32 %v624, %v615
        %v626 = vmul.u32 %v581, %v572
        %v627 = vadd.s32 %v603, %v622
        %vm628 = vc.u32 %v603, %v622
        %v629 = vadd.s32 %v625, 1
        %v630 = vsel %vm628, %v629, %v625
        %v631 = vadd.s32 %v626, %v630
        %v632 = vadd.s32 %v631, 536870912
        %v633 = vshrl.u32 %v632, 30
        %v634 = vshll.u32 %v633, 30
        %v635 = vsub.s32 %v631, %v634
        %vm636 = vcmp.lt.s32.totalorder %v635, 0
        %v637 = vsub.s32 0, %v635
        %v638 = vsel %vm636, %v637, %v635
        %v639 = vclz %v638
        %v640 = vsub.s32 %v639, 2
        %vm641 = vcmp.gt.s32.totalorder 0, %v640
        %v642 = vsel %vm641, 0, %v640
        %v643 = vsub.s32 32, %v642
        %v644 = vshll.u32 %v635, %v642
        %v645 = vshrl.u32 %v627, %v643
        %v646 = vor.u32 %v644, %v645
        %v647 = vsub.s32 4294967266, %v642
        %v648 = vadd.s32 %v647, 127
        %v649 = vshll.u32 %v648, 23
        %v650 = vor.u32 4788187, %v649
        %v651 = vand.u32 2147483647, %v650
        %v653 = vcvt.s32.f32 %v646
        %v654 = vmul.f32 %v653, %v651
        %v655 = vxor.u32 %v654, 2147483648
        %v656 = vsel %vm535, %v655, %v654
        %v657 = vsub.s32 4, %v633
        %v658 = vsel %vm535, %v657, %v633
        %v659 = vsel %vm534, %v531, %v656
        %v660 = vsel %vm534, 0, %v658
        %v661 = vmul.f32 %v659, %v659
        %v662 = vmul.f32 %v661, -0.001358992
        %v663 = vadd.f32 %v662, 0.041655596
        %v664 = vmul.f32 %v661, %v663
        %v665 = vadd.f32 %v664, -0.4999988
        %v666 = vmul.f32 %v661, %v665
        %v667 = vadd.f32 1.0, %v666
        %v668 = vmul.f32 %v659, %v659
        %v669 = vmul.f32 %v668, -0.00019511016
        %v670 = vadd.f32 %v669, 0.008332121
        %v671 = vmul.f32 %v668, %v670
        %v672 = vadd.f32 %v671, -0.16666654
        %v673 = vmul.f32 %v668, %v672
        %v674 = vadd.f32 %v673, 1.0
        %v675 = vmul.f32 %v674, %v659
        %vm676 = vweird.f32 %v531
        %v677 = vadd.s32 %v660, 3
        %v678 = vand.u32 %v677, 3
        %vm679 = vcmp.lt.s32.totalorder %v678, 2
        %vm680 = vcmp.eq.s32.totalorder %v678, 0
        %v681 = vxor.u32 %v675, 2147483648
        %v682 = vsel %vm680, %v667, %v681
        %vm683 = vcmp.eq.s32.totalorder %v678, 2
        %v684 = vxor.u32 %v667, 2147483648
        %v685 = vsel %vm683, %v684, %v675
        %v686 = vsel %vm679, %v682, %v685
        %v687 = vsel %vm676, nan, %v686
        %v688 = vand.u32 2147483647, %v532
        %vm689 = vcmp.le.f32.partialorder %v688, 0.7853982
        %vm690 = vcmp.lt.s32.totalorder %v532, 0
        %v691 = vand.u32 %v532, 2139095040
        %v692 = vshrl.u32 %v691, 23
        %v693 = vsub.s32 %v692, 127
        %v694 = vand.u32 2147483647, %v532
        %v695 = vand.u32 %v694, 8388607
        %v696 = vor.u32 %v695, 8388608
        %v697 = vsub.s32 0, %v696
        %v698 = vadd.s32 %v693, 1
        %vm699 = vcmp.gt.s32.totalorder %v698, 0
        %v700 = vsel %vm699, %v698, 0
        %v701 = vshrl.u32 %v700, 5
        %v702 = vand.u32 %v700, 31
        %v703 = vsub.s32 32, %v702
        %v704 = vshrl.u32 683565275, %v703
        %v705 = vshll.u32 683565275, %v702
        %v706 = vshrl.u32 2475754826, %v703
        %v707 = vor.u32 %v705, %v706
        %v708 = vshll.u32 2475754826, %v702
        %v709 = vshrl.u32 2131351028, %v703
        %v710 = vor.u32 %v708, %v709
        %v711 = vshll.u32 2131351028, %v702
        %v712 = vshrl.u32 2102212464, %v703
        %v713 = vor.u32 %v711, %v712
        %v714 = vshll.u32 2102212464, %v702
        %v715 = vshrl.u32 920167782, %v703
        %v716 = vor.u32 %v714, %v715
        %v717 = vshll.u32 920167782, %v702
        %v718 = vshrl.u32 1326507024, %v703
        %v719 = vor.u32 %v717, %v718
        %vm720 = vcmp.lt.s32.totalorder %v701, 1
        %vm721 = vcmp.lt.s32.totalorder %v701, 2
        %vm722 = vcmp.lt.s32.totalorder %v701, 3
        %vm723 = vcmp.lt.s32.totalorder %v701, 4
        %v724 = vsel %vm720, %v704, %v707
        %v725 = vsel %vm723, %v713, 2102212464
        %v726 = vsel %vm722, %v710, %v725
        %v727 = vsel %vm721, %v724, %v726
        %v728 = vsel %vm720, %v707, %v710
        %v729 = vsel %vm723, %v716, 920167782
        %v730 = vsel %vm722, %v713, %v729
        %v731 = vsel %vm721, %v728, %v730
        %v732 = vsel %vm720, %v710, %v713
        %v733 = vsel %vm723, %v719, 1326507024
        %v734 = vsel %vm722, %v716, %v733
        %v735 = vsel %vm721, %v732, %v734
        %v736 = vshll.u32 %v696, 8
        %v737 = vand.u32 %v736, 65535
        %v738 = vshrl.u32 %v736, 16
        %v739 = vand.u32 %v735, 65535
        %v740 = vshrl.u32 %v735, 16
        %v741 = vmul.u32 %v737, %v739
        %v742 = vmul.u32 %v737, %v740
        %v743 = vmul.u32 %v738, %v739
        %v744 = vmul.u32 %v738, %v740
        %v745 = vshll.u32 %v742, 16
        %v746 = vshrl.u32 %v742, 16
        %v747 = vshll.u32 %v743, 16
        %v748 = vshrl.u32 %v743, 16
        %vm749 = vc.u32 %v741, %v745
        %v750 = vsel %vm749, 1, 0
        %v751 = vadd.s32 %v741, %v745
        %v752 = vadd.s32 %v744, %v750
        %vm753 = vc.u32 %v751, %v747
        %v754 = vsel %vm753, 1, 0
        %v755 = vadd.s32 %v751, %v747
        %v756 = vadd.s32 %v752, %v754
        %v757 = vadd.s32 %v756, %v746
        %v758 = vadd.s32 %v757, %v748
        %v759 = vand.u32 %v736, 65535
        %v760 = vshrl.u32 %v736, 16
        %v761 = vand.u32 %v731, 65535
        %v762 = vshrl.u32 %v731, 16
        %v763 = vmul.u32 %v759, %v761
        %v764 = vmul.u32 %v759, %v762
        %v765 = vmul.u32 %v760, %v761
        %v766 = vmul.u32 %v760, %v762
        %v767 = vshll.u32 %v764, 16
        %v768 = vshrl.u32 %v764, 16
        %v769 = vshll.u32 %v765, 16
        %v770 = vshrl.u32 %v765, 16
        %vm771 = vc.u32 %v763, %v767
        %v772 = vsel %vm771, 1, 0
        %v773 = vadd.s32 %v763, %v767
        %v774 = vadd.s32 %v766, %v772
        %vm775 = vc.u32 %v773, %v769
        %v776 = vsel %vm775, 1, 0
        %v777 = vadd.s32 %v773, %v769
        %v778 = vadd.s32 %v774, %v776
        %v779 = vadd.s32 %v778, %v768
        %v780 = vadd.s32 %v779, %v770
        %v781 = vmul.u32 %v736, %v727
        %v782 = vadd.s32 %v758, %v777
        %vm783 = vc.u32 %v758, %v777
        %v784 = vadd.s32 %v780, 1
        %v785 = vsel %vm783, %v784, %v780
        %v786 = vadd.s32 %v781, %v785
        %v787 = vadd.s32 %v786, 536870912
        %v788 = vshrl.u32 %v787, 30
        %v789 = vshll.u32 %v788, 30
        %v790 = vsub.s32 %v786, %v789
        %vm791 = vcmp.lt.s32.totalorder %v790, 0
        %v792 = vsub.s32 0, %v790
        %v793 = vsel %vm791, %v792, %v790
        %v794 = vclz %v793
        %v795 = vsub.s32 %v794, 2
        %vm796 = vcmp.gt.s32.totalorder 0, %v795
        %v797 = vsel %vm796, 0, %v795
        %v798 = vsub.s32 32, %v797
        %v799 = vshll.u32 %v790, %v797
        %v800 = vshrl.u32 %v782, %v798
        %v801 = vor.u32 %v799, %v800
        %v802 = vsub.s32 4294967266, %v797
        %v803 = vadd.s32 %v802, 127
        %v804 = vshll.u32 %v803, 23
        %v805 = vor.u32 4788187, %v804
        %v806 = vand.u32 2147483647, %v805
        %v808 = vcvt.s32.f32 %v801
        %v809 = vmul.f32 %v808, %v806
        %v810 = vxor.u32 %v809, 2147483648
        %v811 = vsel %vm690, %v810, %v809
        %v812 = vsub.s32 4, %v788
        %v813 = vsel %vm690, %v812, %v788
        %v814 = vsel %vm689, %v532, %v811
        %v815 = vsel %vm689, 0, %v813
        %v816 = vmul.f32 %v814, %v814
        %v817 = vmul.f32 %v816, -0.001358992
        %v818 = vadd.f32 %v817, 0.041655596
        %v819 = vmul.f32 %v816, %v818
        %v820 = vadd.f32 %v819, -0.4999988
        %v821 = vmul.f32 %v816, %v820
        %v822 = vadd.f32 1.0, %v821
        %v823 = vmul.f32 %v814, %v814
        %v824 = vmul.f32 %v823, -0.00019511016
        %v825 = vadd.f32 %v824, 0.008332121
        %v826 = vmul.f32 %v823, %v825
        %v827 = vadd.f32 %v826, -0.16666654
        %v828 = vmul.f32 %v823, %v827
        %v829 = vadd.f32 %v828, 1.0
        %v830 = vmul.f32 %v829, %v814
        %vm831 = vweird.f32 %v532
        %v832 = vadd.s32 %v815, 3
        %v833 = vand.u32 %v832, 3
        %vm834 = vcmp.lt.s32.totalorder %v833, 2
        %vm835 = vcmp.eq.s32.totalorder %v833, 0
        %v836 = vxor.u32 %v830, 2147483648
        %v837 = vsel %vm835, %v822, %v836
        %vm838 = vcmp.eq.s32.totalorder %v833, 2
        %v839 = vxor.u32 %v822, 2147483648
        %v840 = vsel %vm838, %v839, %v830
        %v841 = vsel %vm834, %v837, %v840
        %v842 = vsel %vm831, nan, %v841
        %v843 = vld [vmem:[#allocation5] sm:$0xf]
        %v844 = vld [vmem:[%s4] sm:$0xf]
        %846 = vset.pattern.permute.xlu0 0
        %847 = vperm.xlu0 %846, %v844
        %v848 = vpop.permute.xlu0 %847
        %vm850 = vcmask 31744
        %v852 = vsel %vm850, %v843, 0
        %v855 = vsel %vm433, %v687, 0
        %v858 = vsel %vm433, %v842, 0
        %860 = vmatpush.msra.mxu0 0.0
        %861 = vmatpush.msra.mxu0 0.0
        %862 = vmatpush.msra.mxu0 0.0
        %863 = vmatpush.msra.mxu0 0.0
        %864 = vmatpush.msra.mxu0 0.0
        %865 = vmatpush.msra.mxu0 0.0
        %866 = vmatpush.msra.mxu0 0.0
        %867 = vmatpush.msra.mxu0 0.0
        %868 = vmatpush.msra.mxu0 0.0
        %869 = vmatpush.msra.mxu0 0.0
        %870 = vmatpush.msra.mxu0 0.0
        %871 = vmatpush.msra.mxu0 0.0
        %872 = vmatpush.msra.mxu0 0.0
        %873 = vmatpush.msra.mxu0 0.0
        %874 = vmatpush.msra.mxu0 0.0
        %875 = vmatpush.msra.mxu0 %v855
        %876 = vmatmul.f32.gmra.mxu0 %v852
        %v877 = vpop.f32.mrf.mxu0
        %v878 = vadd.f32 %v848, %v877
        %879 = vdwg.mxu0
        %880 = vmatpush.msra.mxu0 0.0
        %881 = vmatpush.msra.mxu0 0.0
        %882 = vmatpush.msra.mxu0 0.0
        %883 = vmatpush.msra.mxu0 0.0
        %884 = vmatpush.msra.mxu0 0.0
        %885 = vmatpush.msra.mxu0 0.0
        %886 = vmatpush.msra.mxu0 0.0
        %887 = vmatpush.msra.mxu0 0.0
        %888 = vmatpush.msra.mxu0 0.0
        %889 = vmatpush.msra.mxu0 0.0
        %890 = vmatpush.msra.mxu0 0.0
        %891 = vmatpush.msra.mxu0 0.0
        %892 = vmatpush.msra.mxu0 0.0
        %893 = vmatpush.msra.mxu0 0.0
        %894 = vmatpush.msra.mxu0 0.0
        %895 = vmatpush.msra.mxu0 %v858
        %896 = vmatmul.f32.gmra.mxu0 %v852
        %v897 = vpop.f32.mrf.mxu0
        %v898 = vadd.f32 %v848, %v897
        %899 = vdwg.mxu0
        %v900 = vsel %vm433, %v878, 0.0
        %v901 = vrot.slane %v900, 4
        %v902 = vadd.f32 %v900, %v901
        %v903 = vrot.slane %v902, 2
        %v904 = vadd.f32 %v902, %v903
        %v905 = vrot.slane %v904, 1
        %v906 = vadd.f32 %v904, %v905
        %v907 = vsel %vm433, %v898, 0.0
        %v908 = vrot.slane %v907, 4
        %v909 = vadd.f32 %v907, %v908
        %v910 = vrot.slane %v909, 2
        %v911 = vadd.f32 %v909, %v910
        %v912 = vrot.slane %v911, 1
        %v913 = vadd.f32 %v911, %v912
        %v914 = vmul.f32 %v906, %v454
        %v915 = vmul.f32 %v913, %v454
        %v916 = vsub.f32 %v878, %v914
        %v917 = vsub.f32 %v898, %v915
        %v918 = vmul.f32 %v916, %v916
        %v919 = vmul.f32 %v917, %v917
        %v920 = vsel %vm433, %v918, 0.0
        %v921 = vrot.slane %v920, 4
        %v922 = vadd.f32 %v920, %v921
        %v923 = vrot.slane %v922, 2
        %v924 = vadd.f32 %v922, %v923
        %v925 = vrot.slane %v924, 1
        %v926 = vadd.f32 %v924, %v925
        %v927 = vsel %vm433, %v919, 0.0
        %v928 = vrot.slane %v927, 4
        %v929 = vadd.f32 %v927, %v928
        %v930 = vrot.slane %v929, 2
        %v931 = vadd.f32 %v929, %v930
        %v932 = vrot.slane %v931, 1
        %v933 = vadd.f32 %v931, %v932
        %v934 = vmul.f32 %v926, %v454
        %v935 = vmul.f32 %v933, %v454
        %v936 = vadd.f32 %v934, 1e-05
        %v937 = vadd.f32 %v935, 1e-05
        %v938 = vrsqrt.pop %v936
        %v939 = vmul.f32 %v938, %v936
        %v940 = vmul.f32 %v939, %v938
        %v941 = vmul.f32 0.5, %v940
        %v942 = vsub.f32 1.5, %v941
        %v943 = vmul.f32 %v938, %v942
        %vm944 = vweird.f32 %v936
        %vm945 = vweird.f32 %v938
        %vm946 = vmor %vm944, %vm945
        %v947 = vsel %vm946, %v938, %v943
        %v948 = vrsqrt.pop %v937
        %v949 = vmul.f32 %v948, %v937
        %v950 = vmul.f32 %v949, %v948
        %v951 = vmul.f32 0.5, %v950
        %v952 = vsub.f32 1.5, %v951
        %v953 = vmul.f32 %v948, %v952
        %vm954 = vweird.f32 %v937
        %vm955 = vweird.f32 %v948
        %vm956 = vmor %vm954, %vm955
        %v957 = vsel %vm956, %v948, %v953
        %v958 = vmul.f32 %v916, %v947
        %v959 = vmul.f32 %v917, %v957
        %960 = vset.pattern.permute.xlu0 2
        %961 = vperm.xlu0 %960, %v426
        %v962 = vpop.permute.xlu0 %961
        %v964 = vmul.f32 %v962, %v958
        %v965 = vmul.f32 %v962, %v959
        %966 = vset.pattern.permute.xlu0 3
        %967 = vperm.xlu0 %966, %v426
        %v968 = vpop.permute.xlu0 %967
        %v970 = vadd.f32 %v964, %v968
        %v971 = vadd.f32 %v965, %v968
        %v972 = vand.u32 2147483647, %v970
        %vm973 = vcmp.le.f32.partialorder %v972, 0.7853982
        %vm974 = vcmp.lt.s32.totalorder %v970, 0
        %v975 = vand.u32 %v970, 2139095040
        %v976 = vshrl.u32 %v975, 23
        %v977 = vsub.s32 %v976, 127
        %v978 = vand.u32 2147483647, %v970
        %v979 = vand.u32 %v978, 8388607
        %v980 = vor.u32 %v979, 8388608
        %v981 = vsub.s32 0, %v980
        %v982 = vadd.s32 %v977, 1
        %vm983 = vcmp.gt.s32.totalorder %v982, 0
        %v984 = vsel %vm983, %v982, 0
        %v985 = vshrl.u32 %v984, 5
        %v986 = vand.u32 %v984, 31
        %v987 = vsub.s32 32, %v986
        %v988 = vshrl.u32 683565275, %v987
        %v989 = vshll.u32 683565275, %v986
        %v990 = vshrl.u32 2475754826, %v987
        %v991 = vor.u32 %v989, %v990
        %v992 = vshll.u32 2475754826, %v986
        %v993 = vshrl.u32 2131351028, %v987
        %v994 = vor.u32 %v992, %v993
        %v995 = vshll.u32 2131351028, %v986
        %v996 = vshrl.u32 2102212464, %v987
        %v997 = vor.u32 %v995, %v996
        %v998 = vshll.u32 2102212464, %v986
        %v999 = vshrl.u32 920167782, %v987
        %v1000 = vor.u32 %v998, %v999
        %v1001 = vshll.u32 920167782, %v986
        %v1002 = vshrl.u32 1326507024, %v987
        %v1003 = vor.u32 %v1001, %v1002
        %vm1004 = vcmp.lt.s32.totalorder %v985, 1
        %vm1005 = vcmp.lt.s32.totalorder %v985, 2
        %vm1006 = vcmp.lt.s32.totalorder %v985, 3
        %vm1007 = vcmp.lt.s32.totalorder %v985, 4
        %v1008 = vsel %vm1004, %v988, %v991
        %v1009 = vsel %vm1007, %v997, 2102212464
        %v1010 = vsel %vm1006, %v994, %v1009
        %v1011 = vsel %vm1005, %v1008, %v1010
        %v1012 = vsel %vm1004, %v991, %v994
        %v1013 = vsel %vm1007, %v1000, 920167782
        %v1014 = vsel %vm1006, %v997, %v1013
        %v1015 = vsel %vm1005, %v1012, %v1014
        %v1016 = vsel %vm1004, %v994, %v997
        %v1017 = vsel %vm1007, %v1003, 1326507024
        %v1018 = vsel %vm1006, %v1000, %v1017
        %v1019 = vsel %vm1005, %v1016, %v1018
        %v1020 = vshll.u32 %v980, 8
        %v1021 = vand.u32 %v1020, 65535
        %v1022 = vshrl.u32 %v1020, 16
        %v1023 = vand.u32 %v1019, 65535
        %v1024 = vshrl.u32 %v1019, 16
        %v1025 = vmul.u32 %v1021, %v1023
        %v1026 = vmul.u32 %v1021, %v1024
        %v1027 = vmul.u32 %v1022, %v1023
        %v1028 = vmul.u32 %v1022, %v1024
        %v1029 = vshll.u32 %v1026, 16
        %v1030 = vshrl.u32 %v1026, 16
        %v1031 = vshll.u32 %v1027, 16
        %v1032 = vshrl.u32 %v1027, 16
        %vm1033 = vc.u32 %v1025, %v1029
        %v1034 = vsel %vm1033, 1, 0
        %v1035 = vadd.s32 %v1025, %v1029
        %v1036 = vadd.s32 %v1028, %v1034
        %vm1037 = vc.u32 %v1035, %v1031
        %v1038 = vsel %vm1037, 1, 0
        %v1039 = vadd.s32 %v1035, %v1031
        %v1040 = vadd.s32 %v1036, %v1038
        %v1041 = vadd.s32 %v1040, %v1030
        %v1042 = vadd.s32 %v1041, %v1032
        %v1043 = vand.u32 %v1020, 65535
        %v1044 = vshrl.u32 %v1020, 16
        %v1045 = vand.u32 %v1015, 65535
        %v1046 = vshrl.u32 %v1015, 16
        %v1047 = vmul.u32 %v1043, %v1045
        %v1048 = vmul.u32 %v1043, %v1046
        %v1049 = vmul.u32 %v1044, %v1045
        %v1050 = vmul.u32 %v1044, %v1046
        %v1051 = vshll.u32 %v1048, 16
        %v1052 = vshrl.u32 %v1048, 16
        %v1053 = vshll.u32 %v1049, 16
        %v1054 = vshrl.u32 %v1049, 16
        %vm1055 = vc.u32 %v1047, %v1051
        %v1056 = vsel %vm1055, 1, 0
        %v1057 = vadd.s32 %v1047, %v1051
        %v1058 = vadd.s32 %v1050, %v1056
        %vm1059 = vc.u32 %v1057, %v1053
        %v1060 = vsel %vm1059, 1, 0
        %v1061 = vadd.s32 %v1057, %v1053
        %v1062 = vadd.s32 %v1058, %v1060
        %v1063 = vadd.s32 %v1062, %v1052
        %v1064 = vadd.s32 %v1063, %v1054
        %v1065 = vmul.u32 %v1020, %v1011
        %v1066 = vadd.s32 %v1042, %v1061
        %vm1067 = vc.u32 %v1042, %v1061
        %v1068 = vadd.s32 %v1064, 1
        %v1069 = vsel %vm1067, %v1068, %v1064
        %v1070 = vadd.s32 %v1065, %v1069
        %v1071 = vadd.s32 %v1070, 536870912
        %v1072 = vshrl.u32 %v1071, 30
        %v1073 = vshll.u32 %v1072, 30
        %v1074 = vsub.s32 %v1070, %v1073
        %vm1075 = vcmp.lt.s32.totalorder %v1074, 0
        %v1076 = vsub.s32 0, %v1074
        %v1077 = vsel %vm1075, %v1076, %v1074
        %v1078 = vclz %v1077
        %v1079 = vsub.s32 %v1078, 2
        %vm1080 = vcmp.gt.s32.totalorder 0, %v1079
        %v1081 = vsel %vm1080, 0, %v1079
        %v1082 = vsub.s32 32, %v1081
        %v1083 = vshll.u32 %v1074, %v1081
        %v1084 = vshrl.u32 %v1066, %v1082
        %v1085 = vor.u32 %v1083, %v1084
        %v1086 = vsub.s32 4294967266, %v1081
        %v1087 = vadd.s32 %v1086, 127
        %v1088 = vshll.u32 %v1087, 23
        %v1089 = vor.u32 4788187, %v1088
        %v1090 = vand.u32 2147483647, %v1089
        %v1092 = vcvt.s32.f32 %v1085
        %v1093 = vmul.f32 %v1092, %v1090
        %v1094 = vxor.u32 %v1093, 2147483648
        %v1095 = vsel %vm974, %v1094, %v1093
        %v1096 = vsub.s32 4, %v1072
        %v1097 = vsel %vm974, %v1096, %v1072
        %v1098 = vsel %vm973, %v970, %v1095
        %v1099 = vsel %vm973, 0, %v1097
        %v1100 = vmul.f32 %v1098, %v1098
        %v1101 = vmul.f32 %v1100, -0.001358992
        %v1102 = vadd.f32 %v1101, 0.041655596
        %v1103 = vmul.f32 %v1100, %v1102
        %v1104 = vadd.f32 %v1103, -0.4999988
        %v1105 = vmul.f32 %v1100, %v1104
        %v1106 = vadd.f32 1.0, %v1105
        %v1107 = vmul.f32 %v1098, %v1098
        %v1108 = vmul.f32 %v1107, -0.00019511016
        %v1109 = vadd.f32 %v1108, 0.008332121
        %v1110 = vmul.f32 %v1107, %v1109
        %v1111 = vadd.f32 %v1110, -0.16666654
        %v1112 = vmul.f32 %v1107, %v1111
        %v1113 = vadd.f32 %v1112, 1.0
        %v1114 = vmul.f32 %v1113, %v1098
        %vm1115 = vweird.f32 %v970
        %v1116 = vadd.s32 %v1099, 3
        %v1117 = vand.u32 %v1116, 3
        %vm1118 = vcmp.lt.s32.totalorder %v1117, 2
        %vm1119 = vcmp.eq.s32.totalorder %v1117, 0
        %v1120 = vxor.u32 %v1114, 2147483648
        %v1121 = vsel %vm1119, %v1106, %v1120
        %vm1122 = vcmp.eq.s32.totalorder %v1117, 2
        %v1123 = vxor.u32 %v1106, 2147483648
        %v1124 = vsel %vm1122, %v1123, %v1114
        %v1125 = vsel %vm1118, %v1121, %v1124
        %v1126 = vsel %vm1115, nan, %v1125
        %v1127 = vand.u32 2147483647, %v971
        %vm1128 = vcmp.le.f32.partialorder %v1127, 0.7853982
        %vm1129 = vcmp.lt.s32.totalorder %v971, 0
        %v1130 = vand.u32 %v971, 2139095040
        %v1131 = vshrl.u32 %v1130, 23
        %v1132 = vsub.s32 %v1131, 127
        %v1133 = vand.u32 2147483647, %v971
        %v1134 = vand.u32 %v1133, 8388607
        %v1135 = vor.u32 %v1134, 8388608
        %v1136 = vsub.s32 0, %v1135
        %v1137 = vadd.s32 %v1132, 1
        %vm1138 = vcmp.gt.s32.totalorder %v1137, 0
        %v1139 = vsel %vm1138, %v1137, 0
        %v1140 = vshrl.u32 %v1139, 5
        %v1141 = vand.u32 %v1139, 31
        %v1142 = vsub.s32 32, %v1141
        %v1143 = vshrl.u32 683565275, %v1142
        %v1144 = vshll.u32 683565275, %v1141
        %v1145 = vshrl.u32 2475754826, %v1142
        %v1146 = vor.u32 %v1144, %v1145
        %v1147 = vshll.u32 2475754826, %v1141
        %v1148 = vshrl.u32 2131351028, %v1142
        %v1149 = vor.u32 %v1147, %v1148
        %v1150 = vshll.u32 2131351028, %v1141
        %v1151 = vshrl.u32 2102212464, %v1142
        %v1152 = vor.u32 %v1150, %v1151
        %v1153 = vshll.u32 2102212464, %v1141
        %v1154 = vshrl.u32 920167782, %v1142
        %v1155 = vor.u32 %v1153, %v1154
        %v1156 = vshll.u32 920167782, %v1141
        %v1157 = vshrl.u32 1326507024, %v1142
        %v1158 = vor.u32 %v1156, %v1157
        %vm1159 = vcmp.lt.s32.totalorder %v1140, 1
        %vm1160 = vcmp.lt.s32.totalorder %v1140, 2
        %vm1161 = vcmp.lt.s32.totalorder %v1140, 3
        %vm1162 = vcmp.lt.s32.totalorder %v1140, 4
        %v1163 = vsel %vm1159, %v1143, %v1146
        %v1164 = vsel %vm1162, %v1152, 2102212464
        %v1165 = vsel %vm1161, %v1149, %v1164
        %v1166 = vsel %vm1160, %v1163, %v1165
        %v1167 = vsel %vm1159, %v1146, %v1149
        %v1168 = vsel %vm1162, %v1155, 920167782
        %v1169 = vsel %vm1161, %v1152, %v1168
        %v1170 = vsel %vm1160, %v1167, %v1169
        %v1171 = vsel %vm1159, %v1149, %v1152
        %v1172 = vsel %vm1162, %v1158, 1326507024
        %v1173 = vsel %vm1161, %v1155, %v1172
        %v1174 = vsel %vm1160, %v1171, %v1173
        %v1175 = vshll.u32 %v1135, 8
        %v1176 = vand.u32 %v1175, 65535
        %v1177 = vshrl.u32 %v1175, 16
        %v1178 = vand.u32 %v1174, 65535
        %v1179 = vshrl.u32 %v1174, 16
        %v1180 = vmul.u32 %v1176, %v1178
        %v1181 = vmul.u32 %v1176, %v1179
        %v1182 = vmul.u32 %v1177, %v1178
        %v1183 = vmul.u32 %v1177, %v1179
        %v1184 = vshll.u32 %v1181, 16
        %v1185 = vshrl.u32 %v1181, 16
        %v1186 = vshll.u32 %v1182, 16
        %v1187 = vshrl.u32 %v1182, 16
        %vm1188 = vc.u32 %v1180, %v1184
        %v1189 = vsel %vm1188, 1, 0
        %v1190 = vadd.s32 %v1180, %v1184
        %v1191 = vadd.s32 %v1183, %v1189
        %vm1192 = vc.u32 %v1190, %v1186
        %v1193 = vsel %vm1192, 1, 0
        %v1194 = vadd.s32 %v1190, %v1186
        %v1195 = vadd.s32 %v1191, %v1193
        %v1196 = vadd.s32 %v1195, %v1185
        %v1197 = vadd.s32 %v1196, %v1187
        %v1198 = vand.u32 %v1175, 65535
        %v1199 = vshrl.u32 %v1175, 16
        %v1200 = vand.u32 %v1170, 65535
        %v1201 = vshrl.u32 %v1170, 16
        %v1202 = vmul.u32 %v1198, %v1200
        %v1203 = vmul.u32 %v1198, %v1201
        %v1204 = vmul.u32 %v1199, %v1200
        %v1205 = vmul.u32 %v1199, %v1201
        %v1206 = vshll.u32 %v1203, 16
        %v1207 = vshrl.u32 %v1203, 16
        %v1208 = vshll.u32 %v1204, 16
        %v1209 = vshrl.u32 %v1204, 16
        %vm1210 = vc.u32 %v1202, %v1206
        %v1211 = vsel %vm1210, 1, 0
        %v1212 = vadd.s32 %v1202, %v1206
        %v1213 = vadd.s32 %v1205, %v1211
        %vm1214 = vc.u32 %v1212, %v1208
        %v1215 = vsel %vm1214, 1, 0
        %v1216 = vadd.s32 %v1212, %v1208
        %v1217 = vadd.s32 %v1213, %v1215
        %v1218 = vadd.s32 %v1217, %v1207
        %v1219 = vadd.s32 %v1218, %v1209
        %v1220 = vmul.u32 %v1175, %v1166
        %v1221 = vadd.s32 %v1197, %v1216
        %vm1222 = vc.u32 %v1197, %v1216
        %v1223 = vadd.s32 %v1219, 1
        %v1224 = vsel %vm1222, %v1223, %v1219
        %v1225 = vadd.s32 %v1220, %v1224
        %v1226 = vadd.s32 %v1225, 536870912
        %v1227 = vshrl.u32 %v1226, 30
        %v1228 = vshll.u32 %v1227, 30
        %v1229 = vsub.s32 %v1225, %v1228
        %vm1230 = vcmp.lt.s32.totalorder %v1229, 0
        %v1231 = vsub.s32 0, %v1229
        %v1232 = vsel %vm1230, %v1231, %v1229
        %v1233 = vclz %v1232
        %v1234 = vsub.s32 %v1233, 2
        %vm1235 = vcmp.gt.s32.totalorder 0, %v1234
        %v1236 = vsel %vm1235, 0, %v1234
        %v1237 = vsub.s32 32, %v1236
        %v1238 = vshll.u32 %v1229, %v1236
        %v1239 = vshrl.u32 %v1221, %v1237
        %v1240 = vor.u32 %v1238, %v1239
        %v1241 = vsub.s32 4294967266, %v1236
        %v1242 = vadd.s32 %v1241, 127
        %v1243 = vshll.u32 %v1242, 23
        %v1244 = vor.u32 4788187, %v1243
        %v1245 = vand.u32 2147483647, %v1244
        %v1247 = vcvt.s32.f32 %v1240
        %v1248 = vmul.f32 %v1247, %v1245
        %v1249 = vxor.u32 %v1248, 2147483648
        %v1250 = vsel %vm1129, %v1249, %v1248
        %v1251 = vsub.s32 4, %v1227
        %v1252 = vsel %vm1129, %v1251, %v1227
        %v1253 = vsel %vm1128, %v971, %v1250
        %v1254 = vsel %vm1128, 0, %v1252
        %v1255 = vmul.f32 %v1253, %v1253
        %v1256 = vmul.f32 %v1255, -0.001358992
        %v1257 = vadd.f32 %v1256, 0.041655596
        %v1258 = vmul.f32 %v1255, %v1257
        %v1259 = vadd.f32 %v1258, -0.4999988
        %v1260 = vmul.f32 %v1255, %v1259
        %v1261 = vadd.f32 1.0, %v1260
        %v1262 = vmul.f32 %v1253, %v1253
        %v1263 = vmul.f32 %v1262, -0.00019511016
        %v1264 = vadd.f32 %v1263, 0.008332121
        %v1265 = vmul.f32 %v1262, %v1264
        %v1266 = vadd.f32 %v1265, -0.16666654
        %v1267 = vmul.f32 %v1262, %v1266
        %v1268 = vadd.f32 %v1267, 1.0
        %v1269 = vmul.f32 %v1268, %v1253
        %vm1270 = vweird.f32 %v971
        %v1271 = vadd.s32 %v1254, 3
        %v1272 = vand.u32 %v1271, 3
        %vm1273 = vcmp.lt.s32.totalorder %v1272, 2
        %vm1274 = vcmp.eq.s32.totalorder %v1272, 0
        %v1275 = vxor.u32 %v1269, 2147483648
        %v1276 = vsel %vm1274, %v1261, %v1275
        %vm1277 = vcmp.eq.s32.totalorder %v1272, 2
        %v1278 = vxor.u32 %v1261, 2147483648
        %v1279 = vsel %vm1277, %v1278, %v1269
        %v1280 = vsel %vm1273, %v1276, %v1279
        %v1281 = vsel %vm1270, nan, %v1280
        %v1282 = vld [vmem:[#allocation7] sm:$0xff]
        %1284 = vrot.lane.b32.xlu0 %v1282, 124
        %v1285 = vpop.permute.xlu0 %1284
        %1286 = vst [vmem:[#allocation1] ss:$2 sm:$0xff] %v425
        %v1287 = vld.sshfl [vmem:[#allocation1] sm:$0xff pattern:$0x75316420]
        %v1288 = vld.sshfl [vmem:[#allocation1 + $0x8] sm:$0xff pattern:$0x75316420]
        %v1289 = vsel %vm850, %v1285, 0
        %v1291 = vsel %vm433, %v1287, 0
        %v1293 = vsel %vm433, %v1288, 0
        %1295 = vmatpush.msra.mxu0 0.0
        %1296 = vmatpush.msra.mxu0 0.0
        %1297 = vmatpush.msra.mxu0 0.0
        %1298 = vmatpush.msra.mxu0 0.0
        %1299 = vmatpush.msra.mxu0 0.0
        %1300 = vmatpush.msra.mxu0 0.0
        %1301 = vmatpush.msra.mxu0 0.0
        %1302 = vmatpush.msra.mxu0 0.0
        %1303 = vmatpush.msra.mxu0 0.0
        %1304 = vmatpush.msra.mxu0 0.0
        %1305 = vmatpush.msra.mxu0 0.0
        %1306 = vmatpush.msra.mxu0 0.0
        %1307 = vmatpush.msra.mxu0 0.0
        %1308 = vmatpush.msra.mxu0 0.0
        %1309 = vmatpush.msra.mxu0 0.0
        %1310 = vmatpush.msra.mxu0 %v1291
        %1311 = vmatmul.f32.gmra.mxu0 %v1289
        %v1312 = vpop.f32.mrf.mxu0
        %v1313 = vadd.f32 0.0, %v1312
        %1314 = vdwg.mxu0
        %1315 = vmatpush.msra.mxu0 0.0
        %1316 = vmatpush.msra.mxu0 0.0
        %1317 = vmatpush.msra.mxu0 0.0
        %1318 = vmatpush.msra.mxu0 0.0
        %1319 = vmatpush.msra.mxu0 0.0
        %1320 = vmatpush.msra.mxu0 0.0
        %1321 = vmatpush.msra.mxu0 0.0
        %1322 = vmatpush.msra.mxu0 0.0
        %1323 = vmatpush.msra.mxu0 0.0
        %1324 = vmatpush.msra.mxu0 0.0
        %1325 = vmatpush.msra.mxu0 0.0
        %1326 = vmatpush.msra.mxu0 0.0
        %1327 = vmatpush.msra.mxu0 0.0
        %1328 = vmatpush.msra.mxu0 0.0
        %1329 = vmatpush.msra.mxu0 0.0
        %1330 = vmatpush.msra.mxu0 %v1293
        %1331 = vmatmul.f32.gmra.mxu0 %v1289
        %v1332 = vpop.f32.mrf.mxu0
        %v1333 = vadd.f32 0.0, %v1332
        %1334 = vdwg.mxu0
        %v1335 = vsel %vm850, %v1282, 0
        %v1338 = vsel %vm433, %v1126, 0
        %v1341 = vsel %vm433, %v1281, 0
        %1343 = vmatpush.msra.mxu0 0.0
        %1344 = vmatpush.msra.mxu0 0.0
        %1345 = vmatpush.msra.mxu0 0.0
        %1346 = vmatpush.msra.mxu0 0.0
        %1347 = vmatpush.msra.mxu0 0.0
        %1348 = vmatpush.msra.mxu0 0.0
        %1349 = vmatpush.msra.mxu0 0.0
        %1350 = vmatpush.msra.mxu0 0.0
        %1351 = vmatpush.msra.mxu0 0.0
        %1352 = vmatpush.msra.mxu0 0.0
        %1353 = vmatpush.msra.mxu0 0.0
        %1354 = vmatpush.msra.mxu0 0.0
        %1355 = vmatpush.msra.mxu0 0.0
        %1356 = vmatpush.msra.mxu0 0.0
        %1357 = vmatpush.msra.mxu0 0.0
        %1358 = vmatpush.msra.mxu0 %v1338
        %1359 = vmatmul.f32.gmra.mxu0 %v1335
        %v1360 = vpop.f32.mrf.mxu0
        %v1361 = vadd.f32 %v1313, %v1360
        %1362 = vdwg.mxu0
        %1363 = vmatpush.msra.mxu0 0.0
        %1364 = vmatpush.msra.mxu0 0.0
        %1365 = vmatpush.msra.mxu0 0.0
        %1366 = vmatpush.msra.mxu0 0.0
        %1367 = vmatpush.msra.mxu0 0.0
        %1368 = vmatpush.msra.mxu0 0.0
        %1369 = vmatpush.msra.mxu0 0.0
        %1370 = vmatpush.msra.mxu0 0.0
        %1371 = vmatpush.msra.mxu0 0.0
        %1372 = vmatpush.msra.mxu0 0.0
        %1373 = vmatpush.msra.mxu0 0.0
        %1374 = vmatpush.msra.mxu0 0.0
        %1375 = vmatpush.msra.mxu0 0.0
        %1376 = vmatpush.msra.mxu0 0.0
        %1377 = vmatpush.msra.mxu0 0.0
        %1378 = vmatpush.msra.mxu0 %v1341
        %1379 = vmatmul.f32.gmra.mxu0 %v1335
        %v1380 = vpop.f32.mrf.mxu0
        %v1381 = vadd.f32 %v1333, %v1380
        %1382 = vdwg.mxu0
        %v1383 = vld [vmem:[%s6] sm:$0xff]
        %1385 = vset.pattern.permute.xlu0 0
        %1386 = vperm.xlu0 %1385, %v1383
        %v1387 = vpop.permute.xlu0 %1386
        %v1389 = vadd.f32 %v1361, %v1387
        %v1390 = vadd.f32 %v1381, %v1387
        %v1391 = vld [vmem:[%s7] sm:$0xff]
        %v1392 = vld [vmem:[%s422] sm:$0xf]
        %1394 = vst [vmem:[#allocation1] ss:$4 sm:$0xff] %v1392
        %v1395 = vld.sshfl [vmem:[#allocation1] sm:$0xff pattern:$0x73625140]
        %v1396 = vld.sshfl [vmem:[#allocation1 + $0x8] sm:$0xff pattern:$0x73625140]
        %vm1397 = vcmask 15360
        %v1399 = vsel %vm1397, %v1391, 0
        %vm1401 = vcmask 1041408
        %v1402 = vsel %vm1401, %v1395, 0
        %v1404 = vsel %vm1401, %v1396, 0
        %1406 = vmatpush.msra.mxu0 0.0
        %1407 = vmatpush.msra.mxu0 0.0
        %1408 = vmatpush.msra.mxu0 0.0
        %1409 = vmatpush.msra.mxu0 0.0
        %1410 = vmatpush.msra.mxu0 0.0
        %1411 = vmatpush.msra.mxu0 0.0
        %1412 = vmatpush.msra.mxu0 0.0
        %1413 = vmatpush.msra.mxu0 0.0
        %1414 = vmatpush.msra.mxu0 0.0
        %1415 = vmatpush.msra.mxu0 0.0
        %1416 = vmatpush.msra.mxu0 0.0
        %1417 = vmatpush.msra.mxu0 0.0
        %1418 = vmatpush.msra.mxu0 0.0
        %1419 = vmatpush.msra.mxu0 0.0
        %1420 = vmatpush.msra.mxu0 0.0
        %1421 = vmatpush.msra.mxu0 %v1402
        %1422 = vmatmul.f32.gmra.mxu0 %v1399
        %v1423 = vpop.f32.mrf.mxu0
        %v1424 = vadd.f32 0.0, %v1423
        %1425 = vdwg.mxu0
        %1426 = vmatpush.msra.mxu0 0.0
        %1427 = vmatpush.msra.mxu0 0.0
        %1428 = vmatpush.msra.mxu0 0.0
        %1429 = vmatpush.msra.mxu0 0.0
        %1430 = vmatpush.msra.mxu0 0.0
        %1431 = vmatpush.msra.mxu0 0.0
        %1432 = vmatpush.msra.mxu0 0.0
        %1433 = vmatpush.msra.mxu0 0.0
        %1434 = vmatpush.msra.mxu0 0.0
        %1435 = vmatpush.msra.mxu0 0.0
        %1436 = vmatpush.msra.mxu0 0.0
        %1437 = vmatpush.msra.mxu0 0.0
        %1438 = vmatpush.msra.mxu0 0.0
        %1439 = vmatpush.msra.mxu0 0.0
        %1440 = vmatpush.msra.mxu0 0.0
        %1441 = vmatpush.msra.mxu0 %v1404
        %1442 = vmatmul.f32.gmra.mxu0 %v1399
        %v1443 = vpop.f32.mrf.mxu0
        %v1444 = vadd.f32 0.0, %v1443
        %1445 = vdwg.mxu0
        %v1446 = vadd.f32 %v1389, %v1424
        %v1447 = vadd.f32 %v1390, %v1444
        %1448 = vst [vmem:[%s407] sm:$0xff] %v1446
        %1449 = vst [vmem:[%s407 + $0x8] sm:$0xff] %v1447
        %s1450 = sand.u32 %s233, 1
        %s1451 = scalar_lea.sflag [#allocation4], %s1450
        %s1452 = sand.u32 %s233, 1
        %s1453 = smul.addr %s1452, 16
        %s1454 = scalar_lea.vmem [#allocation8], %s1453
        // Predicated region
        $region65: #{tpu_custom_call.1} parent=51 // pred_check
          %p1455 = pneg %p243
        $region66: #{tpu_custom_call.1} parent=51 // pred_check_branch
          %1457 = sbr.rel (%p1455) target = $region68
        $region67: #{tpu_custom_call.1} parent=51 // pred_region
          %s1458 = smul.u32 2, %s31
          %1460 = vsyncadd %s1451, 0
          %s1461 = smul.addr %s30, 2
          %s1462 = sadd.s32 %s1458, %s1461
          %s1463 = smul.addr %s1462, 8
          %s1464 = scalar_lea.hbm %s8, %s1463
          %s1466 = sshll.u32 %s1454, 4
          %s1467 = int_to_ptr.vmem [resolvable:$true] %s1466
          %s1468 = sshll.u32 %s1464, 4
          %s1469 = int_to_ptr.hbm [resolvable:$true] %s1468
          %1471 = dma.vmem_to_hbm [thread:$0]  %s1467, 256, %s1469, %s1451
        $region68: #{tpu_custom_call.1} parent=51 // pred_fallthru
          _
      $region52: #{tpu_custom_call.1} parent=5 // pred_fallthru
        _
      %p1472 = scmp.le.s32.totalorder 2, %s21
      // Predicated region
      $region69: #{tpu_custom_call.1} parent=5 // pred_check
        %p1473 = pneg %p1472
      $region70: #{tpu_custom_call.1} parent=5 // pred_check_branch
        %1475 = sbr.rel (%p1473) target = $region72
      $region71: #{tpu_custom_call.1} parent=5 // pred_region
        %s1476 = ssub.s32 %s21, 2
        // Predicated region
        $region73: #{tpu_custom_call.1} parent=71 // pred_check
          %p1477 = pneg %p249
        $region74: #{tpu_custom_call.1} parent=71 // pred_check_branch
          %1479 = sbr.rel (%p1477) target = $region76
        $region75: #{tpu_custom_call.1} parent=71 // pred_region
          %s1480 = sand.u32 %s234, 1
          %s1481 = scalar_lea.sflag [#allocation4], %s1480
          %s1482 = sand.u32 %s234, 1
          %s1483 = smul.addr %s1482, 16
          %s1484 = scalar_lea.vmem [#allocation8], %s1483
          %1486 = dma.done %s1481, 256
        $region76: #{tpu_custom_call.1} parent=71 // pred_fallthru
          _
      $region72: #{tpu_custom_call.1} parent=5 // pred_fallthru
        _
    $region6: #{tpu_custom_call.1} parent=1 // loop_footer
      %s25 = sadd.s32 1, %s21
    $region7: #{tpu_custom_call.1} parent=1 // loop_footer_branch
      %20 = sbr.rel target = $region3
    $region8: #{tpu_custom_call.1} parent=1 // loop_exit
      _
    %1487 = vsyncpa [#allocation3], 1
    %s1488 = scalar_lea.sflag [#allocation3], 1
    %1489 = vsyncpa %s1488, 1
    %1490 = vsyncpa [#allocation6], 1
    %1491 = vsyncpa [#allocation4], 1
    %s1492 = scalar_lea.sflag [#allocation4], 1
    %1493 = vsyncpa %s1492, 1

</llo_original>
